<compile_context>
chip_gen: v5e
topology: v5e:2x2
jax: 0.10.0
libtpu: 0.0.40
codegen_flags: <defaults>
</compile_context>

<pallas_src>
import functools

import jax
import jax.numpy as jnp
from jax.experimental import pallas as pl
from jax.experimental.pallas import tpu as pltpu

EPS = 1e-5                              # nn.BatchNorm1d default eps
_SQRT_2_OVER_PI = 0.7978845608028654


def _gelu_tanh(x):
    # tanh-form GELU (EUP-friendly).  PyTorch nn.GELU() default is exact erf;
    # deviation is <~1e-3 and accepted per the perf review.
    # TODO(synk): switch to exact-erf GELU if downstream needs bit accuracy.
    return 0.5 * x * (1.0 + jnp.tanh(_SQRT_2_OVER_PI * (x + 0.044715 * x * x * x)))


# ---------------------------------------------------------------------------
# Kernel: one fused ConvTower stage on a slab of b_blk whole sequences
# (rows = b_blk * seq_len), gridded over batch blocks.
# ---------------------------------------------------------------------------
def _conv_tower_layer_kernel(x_ref, s1_ref, t1_ref, w1_ref, b1_ref,
                             s2_ref, t2_ref, w2_ref, b2_ref,
                             out_ref, r_ref, *, seq_len):
    """Shapes:
         x_ref   (rows, Ci)   rows = b_blk * seq_len        (f32 or bf16)
         s1/t1   (1, Ci) f32  w1_ref (K, Ci, Co) bf16   b1 (1, Co) f32
         s2/t2   (1, Co) f32  w2_ref (Co, Co)    bf16   b2 (1, Co) f32
         out_ref (rows//2, Co) bf16
         r_ref   (rows, Co) f32 scratch (pre-pool residual output)
    """
    rows, _ = x_ref.shape
    K = w1_ref.shape[0]
    pad_l = (K - 1) // 2                       # PyTorch padding='same', stride=1
    rows_h = out_ref.shape[0]
    L = seq_len

    # --- ConvBlock 1: folded BatchNorm affine -> GELU -----------------------
    x = x_ref[...].astype(jnp.float32)
    h = _gelu_tanh(x * s1_ref[...] + t1_ref[...])              # (rows, Ci) f32

    # Per-row position inside its own sequence: halo masking is per sequence,
    # so taps never leak across the sequences stacked in this slab.
    l_in_seq = jax.lax.broadcasted_iota(jnp.int32, (rows, 1), 0) % L

    # --- Conv1d(K, 'same'): K accumulating MXU matmuls over rolled taps -----
    y1 = b1_ref[...]                                            # (1, Co) f32
    for k in range(K):
        shift = pad_l - k                # tap_k[l] = h[l + k - pad_l], zero halo
        if shift == 0:
            tap = h
        else:
            rolled = pltpu.roll(h, shift % rows, axis=0)        # XLU
            valid = (l_in_seq >= shift) & (l_in_seq < L + shift)
            tap = jnp.where(valid, rolled, 0.0)
        y1 = y1 + jnp.dot(tap.astype(jnp.bfloat16), w1_ref[k],
                          preferred_element_type=jnp.float32)   # (rows, Co) f32

    # --- Residual(ConvBlock 2): BN -> GELU -> Conv1d(1), then fn(y1) + y1 ---
    h2 = _gelu_tanh(y1 * s2_ref[...] + t2_ref[...]).astype(jnp.bfloat16)
    z = jnp.dot(h2, w2_ref[...], preferred_element_type=jnp.float32) + b2_ref[...]
    r_ref[...] = z + y1                       # Residual.forward: fn(x) + x

    # --- MaxPool1d(2): two stride-2 sublane reads + elementwise max (VPU) ---
    # TODO(synk): a bf16 r-scratch would halve scratch traffic; kept f32 for
    #             robust strided-load lowering.
    ev = r_ref[pl.ds(0, rows_h, stride=2), :]
    od = r_ref[pl.ds(1, rows_h, stride=2), :]
    out_ref[...] = jnp.maximum(ev, od).astype(out_ref.dtype)


# ---------------------------------------------------------------------------
# One-time parameter preparation (hoisted OUT of the jitted forward).
# ---------------------------------------------------------------------------
def _fold_bn(bn):
    # bn stacked as [gamma, beta, running_mean, running_var], shape (4, 1, C)
    gamma, beta, mean, var = bn[0, 0], bn[1, 0], bn[2, 0], bn[3, 0]
    scale = gamma * jax.lax.rsqrt(var + EPS)
    shift = beta - mean * scale
    return (scale[None, :].astype(jnp.float32),
            shift[None, :].astype(jnp.float32))


def prepare_conv_tower_params(params):
    """Fold BN (inference) into affines and cast matmul weights to bf16.  Call
    once per model; do not re-run inside the per-step jitted forward."""
    prepped = []
    for p in params:
        s1, t1 = _fold_bn(p["bn1"])
        s2, t2 = _fold_bn(p["bn2"])
        prepped.append(dict(
            s1=s1, t1=t1,
            w1=p["w1"].astype(jnp.bfloat16),        # (K, Cin, Cout)
            b1=p["b1"].astype(jnp.float32),         # (1, Cout)
            s2=s2, t2=t2,
            w2=p["w2"].astype(jnp.bfloat16),        # (Cout, Cout)
            b2=p["b2"].astype(jnp.float32)))        # (1, Cout)
    return prepped


# ---------------------------------------------------------------------------
# Tiling heuristics.
# ---------------------------------------------------------------------------
def _vmem_limit_bytes():
    # cap/2: ~64 MiB on v5e/v6e (128 MiB physical), ~32 MiB on v7x (64 MiB).
    try:
        cap = int(pltpu.get_tpu_info().vmem_capacity_bytes)
    except Exception:
        cap = 128 * 1024 * 1024
    return max(32 * 1024 * 1024, cap // 2)


def _choose_b_blk(n, seq_len, cin, cout, k, x_itemsize, vmem_budget,
                  target_rows=1024):
    """Largest divisor of n whose (b*seq_len, C) slab keeps the MXU M-dim large
    while the (double-buffered) working set stays inside the VMEM budget."""
    def legal(b):
        rows = b * seq_len
        return rows % 16 == 0 or rows == n * seq_len   # sublane-aligned blocks

    def vmem_need(b):
        rows = b * seq_len
        return (2 * rows * cin * x_itemsize            # double-buffered input
                + 2 * (rows // 2) * cout * 2           # double-buffered bf16 out
                + rows * cout * 4                      # f32 r scratch
                + 2 * (k * cin * cout + cout * cout)   # bf16 weights
                + 16 * (cin + cout))                   # affines / biases

    divisors = [b for b in range(1, n + 1) if n % b == 0 and legal(b)]
    if not divisors:
        return n                                       # full-array block is legal
    fitting = [b for b in divisors
               if b * seq_len <= max(target_rows, seq_len)
               and vmem_need(b) <= vmem_budget]
    return max(fitting) if fitting else min(divisors)


# ---------------------------------------------------------------------------
# Per-layer pallas_call wrapper and full forward.
# ---------------------------------------------------------------------------
def _run_layer(x_flat, lp, n, seq_len):
    """One fused stage.  x_flat: (n*seq_len, Cin), row-major (batch, position)."""
    assert seq_len % 2 == 0, "MaxPool1d(2) stage expects an even sequence length"
    _, cin = x_flat.shape
    k, _, cout = lp["w1"].shape
    half = seq_len // 2

    vmem_limit = _vmem_limit_bytes()
    b_blk = _choose_b_blk(n, seq_len, cin, cout, k,
                          jnp.dtype(x_flat.dtype).itemsize,
                          vmem_budget=int(vmem_limit * 0.6))
    rows = b_blk * seq_len
    rows_out = b_blk * half
    grid = (n // b_blk,)

    kernel = functools.partial(_conv_tower_layer_kernel, seq_len=seq_len)
    param_spec = pl.BlockSpec(memory_space=pltpu.MemorySpace.VMEM)  # whole-array params

    return pl.pallas_call(
        kernel,
        out_shape=jax.ShapeDtypeStruct((n * half, cout), jnp.bfloat16),
        grid=grid,
        in_specs=[pl.BlockSpec((rows, cin), lambda i: (i, 0))] + [param_spec] * 8,
        out_specs=pl.BlockSpec((rows_out, cout), lambda i: (i, 0)),
        scratch_shapes=[pltpu.VMEM((rows, cout), jnp.float32)],
        compiler_params=pltpu.CompilerParams(
            dimension_semantics=("parallel",),
            vmem_limit_bytes=vmem_limit),
    )(x_flat, lp["s1"], lp["t1"], lp["w1"], lp["b1"],
      lp["s2"], lp["t2"], lp["w2"], lp["b2"])


def conv_tower_forward(x_ncl, prepared):
    """PyTorch-equivalent ConvTower forward.  x is [batch, channels, length]."""
    n, _, seq_len = x_ncl.shape
    x = jnp.transpose(x_ncl, (0, 2, 1)).astype(jnp.float32)     # NCL -> NLC
    x = x.reshape(n * seq_len, x.shape[-1])                     # flatten rows (free)
    for lp in prepared:
        x = _run_layer(x, lp, n, seq_len)                       # bf16 activations
        seq_len //= 2
    x = x.reshape(n, seq_len, x.shape[-1]).astype(jnp.float32)
    return jnp.transpose(x, (0, 2, 1))                          # NLC -> NCL


# ---------------------------------------------------------------------------
# Pure-JAX (XLA) reference of the same math (bf16 matmuls, tanh GELU, bf16
# inter-layer activations) for numeric checking.
# ---------------------------------------------------------------------------
def _reference_forward(x_ncl, params):
    x = jnp.transpose(x_ncl, (0, 2, 1)).astype(jnp.float32)     # (N, L, C)
    for p in params:
        bn1 = p["bn1"][:, 0, :]
        h = (x - bn1[2]) * (bn1[0] / jnp.sqrt(bn1[3] + EPS)) + bn1[1]
        h = _gelu_tanh(h).astype(jnp.bfloat16)
        k = p["w1"].shape[0]
        pad_l = (k - 1) // 2
        L = h.shape[1]
        hp = jnp.pad(h, ((0, 0), (pad_l, k - 1 - pad_l), (0, 0)))
        w1 = p["w1"].astype(jnp.bfloat16)
        y1 = sum(jnp.einsum("nlc,cd->nld", hp[:, i:i + L, :], w1[i],
                            preferred_element_type=jnp.float32)
                 for i in range(k)) + p["b1"][0]
        bn2 = p["bn2"][:, 0, :]
        h2 = (y1 - bn2[2]) * (bn2[0] / jnp.sqrt(bn2[3] + EPS)) + bn2[1]
        h2 = _gelu_tanh(h2).astype(jnp.bfloat16)
        z = jnp.einsum("nlc,cd->nld", h2, p["w2"].astype(jnp.bfloat16),
                       preferred_element_type=jnp.float32) + p["b2"][0]
        r = z + y1                                              # Residual: fn(x)+x
        n_, lr, cc = r.shape
        pooled = jnp.max(r.reshape(n_, lr // 2, 2, cc), axis=2)  # MaxPool1d(2)
        x = pooled.astype(jnp.bfloat16).astype(jnp.float32)     # bf16 inter-layer
    return jnp.transpose(x, (0, 2, 1))


def init_conv_tower_params(key, in_channels, out_channels, kernel_size, layers):
    """Deterministic synthetic parameters with the PyTorch module's shapes."""
    params = []
    c_in, c_out, k = in_channels, out_channels, kernel_size
    for _ in range(layers):
        keys = jax.random.split(key, 13)
        key = keys[0]

        gamma1 = 1.0 + 0.1 * jax.random.normal(keys[1], (c_in,))
        beta1 = 0.1 * jax.random.normal(keys[2], (c_in,))
        mean1 = 0.1 * jax.random.normal(keys[3], (c_in,))
        var1 = jax.random.uniform(keys[4], (c_in,), minval=0.5, maxval=1.5)
        bn1 = jnp.stack([gamma1, beta1, mean1, var1])[:, None, :].astype(jnp.float32)

        # PyTorch Conv1d weight (c_out, c_in, k) -> kernel layout (k, c_in, c_out)
        w1_pt = jax.random.normal(keys[5], (c_out, c_in, k)) / jnp.sqrt(c_in * k)
        w1 = jnp.transpose(w1_pt, (2, 1, 0)).astype(jnp.float32)
        b1 = (0.1 * jax.random.normal(keys[6], (c_out,)))[None, :].astype(jnp.float32)

        gamma2 = 1.0 + 0.1 * jax.random.normal(keys[7], (c_out,))
        beta2 = 0.1 * jax.random.normal(keys[8], (c_out,))
        mean2 = 0.1 * jax.random.normal(keys[9], (c_out,))
        var2 = jax.random.uniform(keys[10], (c_out,), minval=0.5, maxval=1.5)
        bn2 = jnp.stack([gamma2, beta2, mean2, var2])[:, None, :].astype(jnp.float32)

        # PyTorch Conv1d weight (c_out, c_out, 1) -> (c_in_dim, c_out_dim)
        w2_pt = jax.random.normal(keys[11], (c_out, c_out, 1)) / jnp.sqrt(c_out)
        w2 = jnp.transpose(w2_pt[:, :, 0], (1, 0)).astype(jnp.float32)
        b2 = (0.1 * jax.random.normal(keys[12], (c_out,)))[None, :].astype(jnp.float32)

        params.append(dict(bn1=bn1, w1=w1, b1=b1, bn2=bn2, w2=w2, b2=b2))
    return params


if __name__ == "__main__":
    # Small shapes consistent with the module: x is [batch, channels, length].
    N, C, L = 2, 8, 32
    K, LAYERS, POOL = 3, 2, 2

    key = jax.random.PRNGKey(0)
    kx, kp = jax.random.split(key)
    x = jax.random.normal(kx, (N, C, L), dtype=jnp.float32)     # NCL, like PyTorch
    params = init_conv_tower_params(kp, C, C, K, LAYERS)

    prepared = prepare_conv_tower_params(params)   # hoisted: prepare weights once
    fwd = jax.jit(conv_tower_forward)
    y = jax.block_until_ready(fwd(x, prepared))

    expected = (N, C, L // (POOL ** LAYERS))
    assert y.shape == expected, (y.shape, expected)
    assert bool(jnp.all(jnp.isfinite(y)))

    # Numeric check against a pure-XLA reference using the same bf16 matmuls /
    # bf16 inter-layer activations (tightened from the previous 1e-1 tolerance).
    y_ref = jax.block_until_ready(_reference_forward(x, params))
    max_err = float(jnp.max(jnp.abs(y - y_ref)))
    assert bool(jnp.allclose(y, y_ref, rtol=1e-2, atol=2e-2)), max_err

    print("KERNEL_OK")
</pallas_src>

<mosaic_0001>
module attributes {stable_mosaic.version = 11 : i64} {
  func.func @_conv_tower_layer_kernel(%arg0: i32, %arg1: memref<64x8xf32, #tpu.memory_space<vmem>>, %arg2: memref<1x8xf32, #tpu.memory_space<vmem>>, %arg3: memref<1x8xf32, #tpu.memory_space<vmem>>, %arg4: memref<3x8x8xbf16, #tpu.memory_space<vmem>>, %arg5: memref<1x8xf32, #tpu.memory_space<vmem>>, %arg6: memref<1x8xf32, #tpu.memory_space<vmem>>, %arg7: memref<1x8xf32, #tpu.memory_space<vmem>>, %arg8: memref<8x8xbf16, #tpu.memory_space<vmem>>, %arg9: memref<1x8xf32, #tpu.memory_space<vmem>>, %arg10: memref<32x8xbf16, #tpu.memory_space<vmem>>, %arg11: memref<64x8xf32, #tpu.memory_space<vmem>>) attributes {dimension_semantics = [#tpu.dimension_semantics<parallel>], iteration_bounds = array<i64: 1>, scalar_prefetch = 0 : i64, scratch_operands = 1 : i64, tpu.core_type = #tpu.core_type<tc>, window_params = [{transform_indices = @transform_0, window_bounds = array<i64: 64, 8>}, {pipeline_mode = #tpu.pipeline_mode<synchronous>, transform_indices = @transform_1, window_bounds = array<i64: 1, 8>}, {pipeline_mode = #tpu.pipeline_mode<synchronous>, transform_indices = @transform_2, window_bounds = array<i64: 1, 8>}, {pipeline_mode = #tpu.pipeline_mode<synchronous>, transform_indices = @transform_3, window_bounds = array<i64: 3, 8, 8>}, {pipeline_mode = #tpu.pipeline_mode<synchronous>, transform_indices = @transform_4, window_bounds = array<i64: 1, 8>}, {pipeline_mode = #tpu.pipeline_mode<synchronous>, transform_indices = @transform_5, window_bounds = array<i64: 1, 8>}, {pipeline_mode = #tpu.pipeline_mode<synchronous>, transform_indices = @transform_6, window_bounds = array<i64: 1, 8>}, {pipeline_mode = #tpu.pipeline_mode<synchronous>, transform_indices = @transform_7, window_bounds = array<i64: 8, 8>}, {pipeline_mode = #tpu.pipeline_mode<synchronous>, transform_indices = @transform_8, window_bounds = array<i64: 1, 8>}, {transform_indices = @transform_9, window_bounds = array<i64: 32, 8>}]} {
    %c0 = arith.constant 0 : index
    %c0_0 = arith.constant 0 : index
    %0 = vector.load %arg1[%c0, %c0_0] : memref<64x8xf32, #tpu.memory_space<vmem>>, vector<64x8xf32>
    %c0_1 = arith.constant 0 : index
    %c0_2 = arith.constant 0 : index
    %1 = vector.load %arg2[%c0_1, %c0_2] : memref<1x8xf32, #tpu.memory_space<vmem>>, vector<1x8xf32>
    %2 = vector.broadcast %1 : vector<1x8xf32> to vector<64x8xf32>
    %3 = arith.mulf %0, %2 : vector<64x8xf32>
    %c0_3 = arith.constant 0 : index
    %c0_4 = arith.constant 0 : index
    %4 = vector.load %arg3[%c0_3, %c0_4] : memref<1x8xf32, #tpu.memory_space<vmem>>, vector<1x8xf32>
    %5 = vector.broadcast %4 : vector<1x8xf32> to vector<64x8xf32>
    %6 = arith.addf %3, %5 : vector<64x8xf32>
    %cst = arith.constant 5.000000e-01 : f32
    %7 = vector.broadcast %cst : f32 to vector<64x8xf32>
    %8 = arith.mulf %7, %6 : vector<64x8xf32>
    %cst_5 = arith.constant 4.471500e-02 : f32
    %9 = vector.broadcast %cst_5 : f32 to vector<64x8xf32>
    %10 = arith.mulf %9, %6 : vector<64x8xf32>
    %11 = arith.mulf %10, %6 : vector<64x8xf32>
    %12 = arith.mulf %11, %6 : vector<64x8xf32>
    %13 = arith.addf %6, %12 : vector<64x8xf32>
    %cst_6 = arith.constant 0.797884583 : f32
    %14 = vector.broadcast %cst_6 : f32 to vector<64x8xf32>
    %15 = arith.mulf %14, %13 : vector<64x8xf32>
    %16 = math.tanh %15 : vector<64x8xf32>
    %cst_7 = arith.constant 1.000000e+00 : f32
    %17 = vector.broadcast %cst_7 : f32 to vector<64x8xf32>
    %18 = arith.addf %17, %16 : vector<64x8xf32>
    %19 = arith.mulf %8, %18 : vector<64x8xf32>
    %20 = tpu.iota {dimensions = array<i32: 0>} : vector<64x1xi32>
    %c32_i32 = arith.constant 32 : i32
    %c0_i32 = arith.constant 0 : i32
    %21 = arith.cmpi eq, %c32_i32, %c0_i32 : i32
    %c1_i32 = arith.constant 1 : i32
    %22 = arith.select %21, %c1_i32, %c32_i32 : i32
    %23 = vector.broadcast %22 : i32 to vector<64x1xi32>
    %24 = arith.remsi %20, %23 : vector<64x1xi32>
    %c0_i32_8 = arith.constant 0 : i32
    %25 = vector.broadcast %c0_i32_8 : i32 to vector<64x1xi32>
    %26 = arith.cmpi ne, %24, %25 : vector<64x1xi32>
    %c0_i32_9 = arith.constant 0 : i32
    %27 = vector.broadcast %c0_i32_9 : i32 to vector<64x1xi32>
    %28 = arith.cmpi slt, %24, %27 : vector<64x1xi32>
    %c0_i32_10 = arith.constant 0 : i32
    %29 = arith.cmpi slt, %22, %c0_i32_10 : i32
    %30 = vector.broadcast %29 : i1 to vector<64x1xi1>
    %31 = vector.broadcast %30 : vector<64x1xi1> to vector<64x1xi1>
    %32 = arith.xori %28, %31 : vector<64x1xi1>
    %33 = arith.andi %32, %26 : vector<64x1xi1>
    %34 = vector.broadcast %22 : i32 to vector<64x1xi32>
    %35 = arith.addi %24, %34 : vector<64x1xi32>
    %36 = arith.select %33, %35, %24 : vector<64x1xi1>, vector<64x1xi32>
    %c0_11 = arith.constant 0 : index
    %c0_12 = arith.constant 0 : index
    %37 = vector.load %arg5[%c0_11, %c0_12] : memref<1x8xf32, #tpu.memory_space<vmem>>, vector<1x8xf32>
    %c1_i32_13 = arith.constant 1 : i32
    %38 = tpu.dynamic_rotate %19 by %c1_i32_13 dim 0 : vector<64x8xf32>, i32 -> vector<64x8xf32>
    %c1_i32_14 = arith.constant 1 : i32
    %39 = vector.broadcast %c1_i32_14 : i32 to vector<64x1xi32>
    %40 = arith.cmpi sge, %36, %39 : vector<64x1xi32>
    %c33_i32 = arith.constant 33 : i32
    %41 = vector.broadcast %c33_i32 : i32 to vector<64x1xi32>
    %42 = arith.cmpi slt, %36, %41 : vector<64x1xi32>
    %43 = arith.andi %40, %42 : vector<64x1xi1>
    %cst_15 = arith.constant 0.000000e+00 : f32
    %44 = vector.shape_cast %43 : vector<64x1xi1> to vector<64x1xi1>
    %45 = vector.broadcast %44 : vector<64x1xi1> to vector<64x8xi1>
    %46 = vector.broadcast %cst_15 : f32 to vector<64x8xf32>
    %47 = arith.select %45, %38, %46 : vector<64x8xi1>, vector<64x8xf32>
    %48 = arith.truncf %47 : vector<64x8xf32> to vector<64x8xbf16>
    %c0_16 = arith.constant 0 : index
    %c0_17 = arith.constant 0 : index
    %c0_18 = arith.constant 0 : index
    %49 = vector.load %arg4[%c0_16, %c0_17, %c0_18] : memref<3x8x8xbf16, #tpu.memory_space<vmem>>, vector<1x8x8xbf16>
    %50 = vector.shape_cast %49 : vector<1x8x8xbf16> to vector<8x8xbf16>
    %cst_19 = arith.constant dense<0.000000e+00> : vector<64x8xf32>
    %51 = tpu.matmul %48, %50, %cst_19 {dimension_numbers = #tpu.dot_dimension_numbers<[1], [0], [0], [1], [0, 0, 1, 1], [], []>} : vector<64x8xbf16>, vector<8x8xbf16>, vector<64x8xf32> -> vector<64x8xf32>
    %52 = vector.broadcast %37 : vector<1x8xf32> to vector<64x8xf32>
    %53 = arith.addf %52, %51 : vector<64x8xf32>
    %54 = arith.truncf %19 : vector<64x8xf32> to vector<64x8xbf16>
    %c1 = arith.constant 1 : index
    %c0_20 = arith.constant 0 : index
    %c0_21 = arith.constant 0 : index
    %55 = vector.load %arg4[%c1, %c0_20, %c0_21] : memref<3x8x8xbf16, #tpu.memory_space<vmem>>, vector<1x8x8xbf16>
    %56 = vector.shape_cast %55 : vector<1x8x8xbf16> to vector<8x8xbf16>
    %cst_22 = arith.constant dense<0.000000e+00> : vector<64x8xf32>
    %57 = tpu.matmul %54, %56, %cst_22 {dimension_numbers = #tpu.dot_dimension_numbers<[1], [0], [0], [1], [0, 0, 1, 1], [], []>} : vector<64x8xbf16>, vector<8x8xbf16>, vector<64x8xf32> -> vector<64x8xf32>
    %58 = arith.addf %53, %57 : vector<64x8xf32>
    %c63_i32 = arith.constant 63 : i32
    %59 = tpu.dynamic_rotate %19 by %c63_i32 dim 0 : vector<64x8xf32>, i32 -> vector<64x8xf32>
    %c-1_i32 = arith.constant -1 : i32
    %60 = vector.broadcast %c-1_i32 : i32 to vector<64x1xi32>
    %61 = arith.cmpi sge, %36, %60 : vector<64x1xi32>
    %c31_i32 = arith.constant 31 : i32
    %62 = vector.broadcast %c31_i32 : i32 to vector<64x1xi32>
    %63 = arith.cmpi slt, %36, %62 : vector<64x1xi32>
    %64 = arith.andi %61, %63 : vector<64x1xi1>
    %cst_23 = arith.constant 0.000000e+00 : f32
    %65 = vector.shape_cast %64 : vector<64x1xi1> to vector<64x1xi1>
    %66 = vector.broadcast %65 : vector<64x1xi1> to vector<64x8xi1>
    %67 = vector.broadcast %cst_23 : f32 to vector<64x8xf32>
    %68 = arith.select %66, %59, %67 : vector<64x8xi1>, vector<64x8xf32>
    %69 = arith.truncf %68 : vector<64x8xf32> to vector<64x8xbf16>
    %c2 = arith.constant 2 : index
    %c0_24 = arith.constant 0 : index
    %c0_25 = arith.constant 0 : index
    %70 = vector.load %arg4[%c2, %c0_24, %c0_25] : memref<3x8x8xbf16, #tpu.memory_space<vmem>>, vector<1x8x8xbf16>
    %71 = vector.shape_cast %70 : vector<1x8x8xbf16> to vector<8x8xbf16>
    %cst_26 = arith.constant dense<0.000000e+00> : vector<64x8xf32>
    %72 = tpu.matmul %69, %71, %cst_26 {dimension_numbers = #tpu.dot_dimension_numbers<[1], [0], [0], [1], [0, 0, 1, 1], [], []>} : vector<64x8xbf16>, vector<8x8xbf16>, vector<64x8xf32> -> vector<64x8xf32>
    %73 = arith.addf %58, %72 : vector<64x8xf32>
    %c0_27 = arith.constant 0 : index
    %c0_28 = arith.constant 0 : index
    %74 = vector.load %arg6[%c0_27, %c0_28] : memref<1x8xf32, #tpu.memory_space<vmem>>, vector<1x8xf32>
    %75 = vector.broadcast %74 : vector<1x8xf32> to vector<64x8xf32>
    %76 = arith.mulf %73, %75 : vector<64x8xf32>
    %c0_29 = arith.constant 0 : index
    %c0_30 = arith.constant 0 : index
    %77 = vector.load %arg7[%c0_29, %c0_30] : memref<1x8xf32, #tpu.memory_space<vmem>>, vector<1x8xf32>
    %78 = vector.broadcast %77 : vector<1x8xf32> to vector<64x8xf32>
    %79 = arith.addf %76, %78 : vector<64x8xf32>
    %cst_31 = arith.constant 5.000000e-01 : f32
    %80 = vector.broadcast %cst_31 : f32 to vector<64x8xf32>
    %81 = arith.mulf %80, %79 : vector<64x8xf32>
    %cst_32 = arith.constant 4.471500e-02 : f32
    %82 = vector.broadcast %cst_32 : f32 to vector<64x8xf32>
    %83 = arith.mulf %82, %79 : vector<64x8xf32>
    %84 = arith.mulf %83, %79 : vector<64x8xf32>
    %85 = arith.mulf %84, %79 : vector<64x8xf32>
    %86 = arith.addf %79, %85 : vector<64x8xf32>
    %cst_33 = arith.constant 0.797884583 : f32
    %87 = vector.broadcast %cst_33 : f32 to vector<64x8xf32>
    %88 = arith.mulf %87, %86 : vector<64x8xf32>
    %89 = math.tanh %88 : vector<64x8xf32>
    %cst_34 = arith.constant 1.000000e+00 : f32
    %90 = vector.broadcast %cst_34 : f32 to vector<64x8xf32>
    %91 = arith.addf %90, %89 : vector<64x8xf32>
    %92 = arith.mulf %81, %91 : vector<64x8xf32>
    %93 = arith.truncf %92 : vector<64x8xf32> to vector<64x8xbf16>
    %c0_35 = arith.constant 0 : index
    %c0_36 = arith.constant 0 : index
    %94 = vector.load %arg8[%c0_35, %c0_36] : memref<8x8xbf16, #tpu.memory_space<vmem>>, vector<8x8xbf16>
    %cst_37 = arith.constant dense<0.000000e+00> : vector<64x8xf32>
    %95 = tpu.matmul %93, %94, %cst_37 {dimension_numbers = #tpu.dot_dimension_numbers<[1], [0], [0], [1], [0, 0, 1, 1], [], []>} : vector<64x8xbf16>, vector<8x8xbf16>, vector<64x8xf32> -> vector<64x8xf32>
    %c0_38 = arith.constant 0 : index
    %c0_39 = arith.constant 0 : index
    %96 = vector.load %arg9[%c0_38, %c0_39] : memref<1x8xf32, #tpu.memory_space<vmem>>, vector<1x8xf32>
    %97 = vector.broadcast %96 : vector<1x8xf32> to vector<64x8xf32>
    %98 = arith.addf %95, %97 : vector<64x8xf32>
    %99 = arith.addf %98, %73 : vector<64x8xf32>
    %c0_40 = arith.constant 0 : index
    %c0_41 = arith.constant 0 : index
    %100 = vector.load %arg11[%c0_40, %c0_41] : memref<64x8xf32, #tpu.memory_space<vmem>>, vector<64x8xf32>
    tpu.vector_store %arg11[%c0_40, %c0_41], %99 {strides = array<i32>} : memref<64x8xf32, #tpu.memory_space<vmem>>, vector<64x8xf32>,
    %c0_42 = arith.constant 0 : index
    %c0_43 = arith.constant 0 : index
    %101 = tpu.strided_load %arg11[%c0_42, %c0_43] {strides = array<i32: 2, 1>} : memref<64x8xf32, #tpu.memory_space<vmem>>, vector<32x8xf32>
    %c1_44 = arith.constant 1 : index
    %c0_45 = arith.constant 0 : index
    %102 = tpu.strided_load %arg11[%c1_44, %c0_45] {strides = array<i32: 2, 1>} : memref<64x8xf32, #tpu.memory_space<vmem>>, vector<32x8xf32>
    %103 = arith.maximumf %101, %102 : vector<32x8xf32>
    %104 = arith.truncf %103 : vector<32x8xf32> to vector<32x8xbf16>
    %c0_46 = arith.constant 0 : index
    %c0_47 = arith.constant 0 : index
    %105 = vector.load %arg10[%c0_46, %c0_47] : memref<32x8xbf16, #tpu.memory_space<vmem>>, vector<32x8xbf16>
    tpu.vector_store %arg10[%c0_46, %c0_47], %104 {strides = array<i32>} : memref<32x8xbf16, #tpu.memory_space<vmem>>, vector<32x8xbf16>,
    return
  }
  func.func @transform_0(%arg0: i32) -> (i32, i32) {
    %c0_i32 = arith.constant 0 : i32
    %c0_i32_0 = arith.constant 0 : i32
    return %arg0, %c0_i32 : i32, i32
  }
  func.func @transform_1(%arg0: i32) -> (i32, i32) {
    %c0_i32 = arith.constant 0 : i32
    %c0_i32_0 = arith.constant 0 : i32
    %c0_i32_1 = arith.constant 0 : i32
    return %c0_i32, %c0_i32_0 : i32, i32
  }
  func.func @transform_2(%arg0: i32) -> (i32, i32) {
    %c0_i32 = arith.constant 0 : i32
    %c0_i32_0 = arith.constant 0 : i32
    %c0_i32_1 = arith.constant 0 : i32
    return %c0_i32, %c0_i32_0 : i32, i32
  }
  func.func @transform_3(%arg0: i32) -> (i32, i32, i32) {
    %c0_i32 = arith.constant 0 : i32
    %c0_i32_0 = arith.constant 0 : i32
    %c0_i32_1 = arith.constant 0 : i32
    %c0_i32_2 = arith.constant 0 : i32
    return %c0_i32, %c0_i32_0, %c0_i32_1 : i32, i32, i32
  }
  func.func @transform_4(%arg0: i32) -> (i32, i32) {
    %c0_i32 = arith.constant 0 : i32
    %c0_i32_0 = arith.constant 0 : i32
    %c0_i32_1 = arith.constant 0 : i32
    return %c0_i32, %c0_i32_0 : i32, i32
  }
  func.func @transform_5(%arg0: i32) -> (i32, i32) {
    %c0_i32 = arith.constant 0 : i32
    %c0_i32_0 = arith.constant 0 : i32
    %c0_i32_1 = arith.constant 0 : i32
    return %c0_i32, %c0_i32_0 : i32, i32
  }
  func.func @transform_6(%arg0: i32) -> (i32, i32) {
    %c0_i32 = arith.constant 0 : i32
    %c0_i32_0 = arith.constant 0 : i32
    %c0_i32_1 = arith.constant 0 : i32
    return %c0_i32, %c0_i32_0 : i32, i32
  }
  func.func @transform_7(%arg0: i32) -> (i32, i32) {
    %c0_i32 = arith.constant 0 : i32
    %c0_i32_0 = arith.constant 0 : i32
    %c0_i32_1 = arith.constant 0 : i32
    return %c0_i32, %c0_i32_0 : i32, i32
  }
  func.func @transform_8(%arg0: i32) -> (i32, i32) {
    %c0_i32 = arith.constant 0 : i32
    %c0_i32_0 = arith.constant 0 : i32
    %c0_i32_1 = arith.constant 0 : i32
    return %c0_i32, %c0_i32_0 : i32, i32
  }
  func.func @transform_9(%arg0: i32) -> (i32, i32) {
    %c0_i32 = arith.constant 0 : i32
    %c0_i32_0 = arith.constant 0 : i32
    return %arg0, %c0_i32 : i32, i32
  }
}

module attributes {stable_mosaic.version = 11 : i64} {
  func.func @_conv_tower_layer_kernel(%arg0: i32, %arg1: memref<32x8xbf16, #tpu.memory_space<vmem>>, %arg2: memref<1x8xf32, #tpu.memory_space<vmem>>, %arg3: memref<1x8xf32, #tpu.memory_space<vmem>>, %arg4: memref<3x8x8xbf16, #tpu.memory_space<vmem>>, %arg5: memref<1x8xf32, #tpu.memory_space<vmem>>, %arg6: memref<1x8xf32, #tpu.memory_space<vmem>>, %arg7: memref<1x8xf32, #tpu.memory_space<vmem>>, %arg8: memref<8x8xbf16, #tpu.memory_space<vmem>>, %arg9: memref<1x8xf32, #tpu.memory_space<vmem>>, %arg10: memref<16x8xbf16, #tpu.memory_space<vmem>>, %arg11: memref<32x8xf32, #tpu.memory_space<vmem>>) attributes {dimension_semantics = [#tpu.dimension_semantics<parallel>], iteration_bounds = array<i64: 1>, scalar_prefetch = 0 : i64, scratch_operands = 1 : i64, tpu.core_type = #tpu.core_type<tc>, window_params = [{transform_indices = @transform_0, window_bounds = array<i64: 32, 8>}, {pipeline_mode = #tpu.pipeline_mode<synchronous>, transform_indices = @transform_1, window_bounds = array<i64: 1, 8>}, {pipeline_mode = #tpu.pipeline_mode<synchronous>, transform_indices = @transform_2, window_bounds = array<i64: 1, 8>}, {pipeline_mode = #tpu.pipeline_mode<synchronous>, transform_indices = @transform_3, window_bounds = array<i64: 3, 8, 8>}, {pipeline_mode = #tpu.pipeline_mode<synchronous>, transform_indices = @transform_4, window_bounds = array<i64: 1, 8>}, {pipeline_mode = #tpu.pipeline_mode<synchronous>, transform_indices = @transform_5, window_bounds = array<i64: 1, 8>}, {pipeline_mode = #tpu.pipeline_mode<synchronous>, transform_indices = @transform_6, window_bounds = array<i64: 1, 8>}, {pipeline_mode = #tpu.pipeline_mode<synchronous>, transform_indices = @transform_7, window_bounds = array<i64: 8, 8>}, {pipeline_mode = #tpu.pipeline_mode<synchronous>, transform_indices = @transform_8, window_bounds = array<i64: 1, 8>}, {transform_indices = @transform_9, window_bounds = array<i64: 16, 8>}]} {
    %c0 = arith.constant 0 : index
    %c0_0 = arith.constant 0 : index
    %0 = vector.load %arg1[%c0, %c0_0] : memref<32x8xbf16, #tpu.memory_space<vmem>>, vector<32x8xbf16>
    %1 = arith.extf %0 : vector<32x8xbf16> to vector<32x8xf32>
    %c0_1 = arith.constant 0 : index
    %c0_2 = arith.constant 0 : index
    %2 = vector.load %arg2[%c0_1, %c0_2] : memref<1x8xf32, #tpu.memory_space<vmem>>, vector<1x8xf32>
    %3 = vector.broadcast %2 : vector<1x8xf32> to vector<32x8xf32>
    %4 = arith.mulf %1, %3 : vector<32x8xf32>
    %c0_3 = arith.constant 0 : index
    %c0_4 = arith.constant 0 : index
    %5 = vector.load %arg3[%c0_3, %c0_4] : memref<1x8xf32, #tpu.memory_space<vmem>>, vector<1x8xf32>
    %6 = vector.broadcast %5 : vector<1x8xf32> to vector<32x8xf32>
    %7 = arith.addf %4, %6 : vector<32x8xf32>
    %cst = arith.constant 5.000000e-01 : f32
    %8 = vector.broadcast %cst : f32 to vector<32x8xf32>
    %9 = arith.mulf %8, %7 : vector<32x8xf32>
    %cst_5 = arith.constant 4.471500e-02 : f32
    %10 = vector.broadcast %cst_5 : f32 to vector<32x8xf32>
    %11 = arith.mulf %10, %7 : vector<32x8xf32>
    %12 = arith.mulf %11, %7 : vector<32x8xf32>
    %13 = arith.mulf %12, %7 : vector<32x8xf32>
    %14 = arith.addf %7, %13 : vector<32x8xf32>
    %cst_6 = arith.constant 0.797884583 : f32
    %15 = vector.broadcast %cst_6 : f32 to vector<32x8xf32>
    %16 = arith.mulf %15, %14 : vector<32x8xf32>
    %17 = math.tanh %16 : vector<32x8xf32>
    %cst_7 = arith.constant 1.000000e+00 : f32
    %18 = vector.broadcast %cst_7 : f32 to vector<32x8xf32>
    %19 = arith.addf %18, %17 : vector<32x8xf32>
    %20 = arith.mulf %9, %19 : vector<32x8xf32>
    %21 = tpu.iota {dimensions = array<i32: 0>} : vector<32x1xi32>
    %c16_i32 = arith.constant 16 : i32
    %c0_i32 = arith.constant 0 : i32
    %22 = arith.cmpi eq, %c16_i32, %c0_i32 : i32
    %c1_i32 = arith.constant 1 : i32
    %23 = arith.select %22, %c1_i32, %c16_i32 : i32
    %24 = vector.broadcast %23 : i32 to vector<32x1xi32>
    %25 = arith.remsi %21, %24 : vector<32x1xi32>
    %c0_i32_8 = arith.constant 0 : i32
    %26 = vector.broadcast %c0_i32_8 : i32 to vector<32x1xi32>
    %27 = arith.cmpi ne, %25, %26 : vector<32x1xi32>
    %c0_i32_9 = arith.constant 0 : i32
    %28 = vector.broadcast %c0_i32_9 : i32 to vector<32x1xi32>
    %29 = arith.cmpi slt, %25, %28 : vector<32x1xi32>
    %c0_i32_10 = arith.constant 0 : i32
    %30 = arith.cmpi slt, %23, %c0_i32_10 : i32
    %31 = vector.broadcast %30 : i1 to vector<32x1xi1>
    %32 = vector.broadcast %31 : vector<32x1xi1> to vector<32x1xi1>
    %33 = arith.xori %29, %32 : vector<32x1xi1>
    %34 = arith.andi %33, %27 : vector<32x1xi1>
    %35 = vector.broadcast %23 : i32 to vector<32x1xi32>
    %36 = arith.addi %25, %35 : vector<32x1xi32>
    %37 = arith.select %34, %36, %25 : vector<32x1xi1>, vector<32x1xi32>
    %c0_11 = arith.constant 0 : index
    %c0_12 = arith.constant 0 : index
    %38 = vector.load %arg5[%c0_11, %c0_12] : memref<1x8xf32, #tpu.memory_space<vmem>>, vector<1x8xf32>
    %c1_i32_13 = arith.constant 1 : i32
    %39 = tpu.dynamic_rotate %20 by %c1_i32_13 dim 0 : vector<32x8xf32>, i32 -> vector<32x8xf32>
    %c1_i32_14 = arith.constant 1 : i32
    %40 = vector.broadcast %c1_i32_14 : i32 to vector<32x1xi32>
    %41 = arith.cmpi sge, %37, %40 : vector<32x1xi32>
    %c17_i32 = arith.constant 17 : i32
    %42 = vector.broadcast %c17_i32 : i32 to vector<32x1xi32>
    %43 = arith.cmpi slt, %37, %42 : vector<32x1xi32>
    %44 = arith.andi %41, %43 : vector<32x1xi1>
    %cst_15 = arith.constant 0.000000e+00 : f32
    %45 = vector.shape_cast %44 : vector<32x1xi1> to vector<32x1xi1>
    %46 = vector.broadcast %45 : vector<32x1xi1> to vector<32x8xi1>
    %47 = vector.broadcast %cst_15 : f32 to vector<32x8xf32>
    %48 = arith.select %46, %39, %47 : vector<32x8xi1>, vector<32x8xf32>
    %49 = arith.truncf %48 : vector<32x8xf32> to vector<32x8xbf16>
    %c0_16 = arith.constant 0 : index
    %c0_17 = arith.constant 0 : index
    %c0_18 = arith.constant 0 : index
    %50 = vector.load %arg4[%c0_16, %c0_17, %c0_18] : memref<3x8x8xbf16, #tpu.memory_space<vmem>>, vector<1x8x8xbf16>
    %51 = vector.shape_cast %50 : vector<1x8x8xbf16> to vector<8x8xbf16>
    %cst_19 = arith.constant dense<0.000000e+00> : vector<32x8xf32>
    %52 = tpu.matmul %49, %51, %cst_19 {dimension_numbers = #tpu.dot_dimension_numbers<[1], [0], [0], [1], [0, 0, 1, 1], [], []>} : vector<32x8xbf16>, vector<8x8xbf16>, vector<32x8xf32> -> vector<32x8xf32>
    %53 = vector.broadcast %38 : vector<1x8xf32> to vector<32x8xf32>
    %54 = arith.addf %53, %52 : vector<32x8xf32>
    %55 = arith.truncf %20 : vector<32x8xf32> to vector<32x8xbf16>
    %c1 = arith.constant 1 : index
    %c0_20 = arith.constant 0 : index
    %c0_21 = arith.constant 0 : index
    %56 = vector.load %arg4[%c1, %c0_20, %c0_21] : memref<3x8x8xbf16, #tpu.memory_space<vmem>>, vector<1x8x8xbf16>
    %57 = vector.shape_cast %56 : vector<1x8x8xbf16> to vector<8x8xbf16>
    %cst_22 = arith.constant dense<0.000000e+00> : vector<32x8xf32>
    %58 = tpu.matmul %55, %57, %cst_22 {dimension_numbers = #tpu.dot_dimension_numbers<[1], [0], [0], [1], [0, 0, 1, 1], [], []>} : vector<32x8xbf16>, vector<8x8xbf16>, vector<32x8xf32> -> vector<32x8xf32>
    %59 = arith.addf %54, %58 : vector<32x8xf32>
    %c31_i32 = arith.constant 31 : i32
    %60 = tpu.dynamic_rotate %20 by %c31_i32 dim 0 : vector<32x8xf32>, i32 -> vector<32x8xf32>
    %c-1_i32 = arith.constant -1 : i32
    %61 = vector.broadcast %c-1_i32 : i32 to vector<32x1xi32>
    %62 = arith.cmpi sge, %37, %61 : vector<32x1xi32>
    %c15_i32 = arith.constant 15 : i32
    %63 = vector.broadcast %c15_i32 : i32 to vector<32x1xi32>
    %64 = arith.cmpi slt, %37, %63 : vector<32x1xi32>
    %65 = arith.andi %62, %64 : vector<32x1xi1>
    %cst_23 = arith.constant 0.000000e+00 : f32
    %66 = vector.shape_cast %65 : vector<32x1xi1> to vector<32x1xi1>
    %67 = vector.broadcast %66 : vector<32x1xi1> to vector<32x8xi1>
    %68 = vector.broadcast %cst_23 : f32 to vector<32x8xf32>
    %69 = arith.select %67, %60, %68 : vector<32x8xi1>, vector<32x8xf32>
    %70 = arith.truncf %69 : vector<32x8xf32> to vector<32x8xbf16>
    %c2 = arith.constant 2 : index
    %c0_24 = arith.constant 0 : index
    %c0_25 = arith.constant 0 : index
    %71 = vector.load %arg4[%c2, %c0_24, %c0_25] : memref<3x8x8xbf16, #tpu.memory_space<vmem>>, vector<1x8x8xbf16>
    %72 = vector.shape_cast %71 : vector<1x8x8xbf16> to vector<8x8xbf16>
    %cst_26 = arith.constant dense<0.000000e+00> : vector<32x8xf32>
    %73 = tpu.matmul %70, %72, %cst_26 {dimension_numbers = #tpu.dot_dimension_numbers<[1], [0], [0], [1], [0, 0, 1, 1], [], []>} : vector<32x8xbf16>, vector<8x8xbf16>, vector<32x8xf32> -> vector<32x8xf32>
    %74 = arith.addf %59, %73 : vector<32x8xf32>
    %c0_27 = arith.constant 0 : index
    %c0_28 = arith.constant 0 : index
    %75 = vector.load %arg6[%c0_27, %c0_28] : memref<1x8xf32, #tpu.memory_space<vmem>>, vector<1x8xf32>
    %76 = vector.broadcast %75 : vector<1x8xf32> to vector<32x8xf32>
    %77 = arith.mulf %74, %76 : vector<32x8xf32>
    %c0_29 = arith.constant 0 : index
    %c0_30 = arith.constant 0 : index
    %78 = vector.load %arg7[%c0_29, %c0_30] : memref<1x8xf32, #tpu.memory_space<vmem>>, vector<1x8xf32>
    %79 = vector.broadcast %78 : vector<1x8xf32> to vector<32x8xf32>
    %80 = arith.addf %77, %79 : vector<32x8xf32>
    %cst_31 = arith.constant 5.000000e-01 : f32
    %81 = vector.broadcast %cst_31 : f32 to vector<32x8xf32>
    %82 = arith.mulf %81, %80 : vector<32x8xf32>
    %cst_32 = arith.constant 4.471500e-02 : f32
    %83 = vector.broadcast %cst_32 : f32 to vector<32x8xf32>
    %84 = arith.mulf %83, %80 : vector<32x8xf32>
    %85 = arith.mulf %84, %80 : vector<32x8xf32>
    %86 = arith.mulf %85, %80 : vector<32x8xf32>
    %87 = arith.addf %80, %86 : vector<32x8xf32>
    %cst_33 = arith.constant 0.797884583 : f32
    %88 = vector.broadcast %cst_33 : f32 to vector<32x8xf32>
    %89 = arith.mulf %88, %87 : vector<32x8xf32>
    %90 = math.tanh %89 : vector<32x8xf32>
    %cst_34 = arith.constant 1.000000e+00 : f32
    %91 = vector.broadcast %cst_34 : f32 to vector<32x8xf32>
    %92 = arith.addf %91, %90 : vector<32x8xf32>
    %93 = arith.mulf %82, %92 : vector<32x8xf32>
    %94 = arith.truncf %93 : vector<32x8xf32> to vector<32x8xbf16>
    %c0_35 = arith.constant 0 : index
    %c0_36 = arith.constant 0 : index
    %95 = vector.load %arg8[%c0_35, %c0_36] : memref<8x8xbf16, #tpu.memory_space<vmem>>, vector<8x8xbf16>
    %cst_37 = arith.constant dense<0.000000e+00> : vector<32x8xf32>
    %96 = tpu.matmul %94, %95, %cst_37 {dimension_numbers = #tpu.dot_dimension_numbers<[1], [0], [0], [1], [0, 0, 1, 1], [], []>} : vector<32x8xbf16>, vector<8x8xbf16>, vector<32x8xf32> -> vector<32x8xf32>
    %c0_38 = arith.constant 0 : index
    %c0_39 = arith.constant 0 : index
    %97 = vector.load %arg9[%c0_38, %c0_39] : memref<1x8xf32, #tpu.memory_space<vmem>>, vector<1x8xf32>
    %98 = vector.broadcast %97 : vector<1x8xf32> to vector<32x8xf32>
    %99 = arith.addf %96, %98 : vector<32x8xf32>
    %100 = arith.addf %99, %74 : vector<32x8xf32>
    %c0_40 = arith.constant 0 : index
    %c0_41 = arith.constant 0 : index
    %101 = vector.load %arg11[%c0_40, %c0_41] : memref<32x8xf32, #tpu.memory_space<vmem>>, vector<32x8xf32>
    tpu.vector_store %arg11[%c0_40, %c0_41], %100 {strides = array<i32>} : memref<32x8xf32, #tpu.memory_space<vmem>>, vector<32x8xf32>,
    %c0_42 = arith.constant 0 : index
    %c0_43 = arith.constant 0 : index
    %102 = tpu.strided_load %arg11[%c0_42, %c0_43] {strides = array<i32: 2, 1>} : memref<32x8xf32, #tpu.memory_space<vmem>>, vector<16x8xf32>
    %c1_44 = arith.constant 1 : index
    %c0_45 = arith.constant 0 : index
    %103 = tpu.strided_load %arg11[%c1_44, %c0_45] {strides = array<i32: 2, 1>} : memref<32x8xf32, #tpu.memory_space<vmem>>, vector<16x8xf32>
    %104 = arith.maximumf %102, %103 : vector<16x8xf32>
    %105 = arith.truncf %104 : vector<16x8xf32> to vector<16x8xbf16>
    %c0_46 = arith.constant 0 : index
    %c0_47 = arith.constant 0 : index
    %106 = vector.load %arg10[%c0_46, %c0_47] : memref<16x8xbf16, #tpu.memory_space<vmem>>, vector<16x8xbf16>
    tpu.vector_store %arg10[%c0_46, %c0_47], %105 {strides = array<i32>} : memref<16x8xbf16, #tpu.memory_space<vmem>>, vector<16x8xbf16>,
    return
  }
  func.func @transform_0(%arg0: i32) -> (i32, i32) {
    %c0_i32 = arith.constant 0 : i32
    %c0_i32_0 = arith.constant 0 : i32
    return %arg0, %c0_i32 : i32, i32
  }
  func.func @transform_1(%arg0: i32) -> (i32, i32) {
    %c0_i32 = arith.constant 0 : i32
    %c0_i32_0 = arith.constant 0 : i32
    %c0_i32_1 = arith.constant 0 : i32
    return %c0_i32, %c0_i32_0 : i32, i32
  }
  func.func @transform_2(%arg0: i32) -> (i32, i32) {
    %c0_i32 = arith.constant 0 : i32
    %c0_i32_0 = arith.constant 0 : i32
    %c0_i32_1 = arith.constant 0 : i32
    return %c0_i32, %c0_i32_0 : i32, i32
  }
  func.func @transform_3(%arg0: i32) -> (i32, i32, i32) {
    %c0_i32 = arith.constant 0 : i32
    %c0_i32_0 = arith.constant 0 : i32
    %c0_i32_1 = arith.constant 0 : i32
    %c0_i32_2 = arith.constant 0 : i32
    return %c0_i32, %c0_i32_0, %c0_i32_1 : i32, i32, i32
  }
  func.func @transform_4(%arg0: i32) -> (i32, i32) {
    %c0_i32 = arith.constant 0 : i32
    %c0_i32_0 = arith.constant 0 : i32
    %c0_i32_1 = arith.constant 0 : i32
    return %c0_i32, %c0_i32_0 : i32, i32
  }
  func.func @transform_5(%arg0: i32) -> (i32, i32) {
    %c0_i32 = arith.constant 0 : i32
    %c0_i32_0 = arith.constant 0 : i32
    %c0_i32_1 = arith.constant 0 : i32
    return %c0_i32, %c0_i32_0 : i32, i32
  }
  func.func @transform_6(%arg0: i32) -> (i32, i32) {
    %c0_i32 = arith.constant 0 : i32
    %c0_i32_0 = arith.constant 0 : i32
    %c0_i32_1 = arith.constant 0 : i32
    return %c0_i32, %c0_i32_0 : i32, i32
  }
  func.func @transform_7(%arg0: i32) -> (i32, i32) {
    %c0_i32 = arith.constant 0 : i32
    %c0_i32_0 = arith.constant 0 : i32
    %c0_i32_1 = arith.constant 0 : i32
    return %c0_i32, %c0_i32_0 : i32, i32
  }
  func.func @transform_8(%arg0: i32) -> (i32, i32) {
    %c0_i32 = arith.constant 0 : i32
    %c0_i32_0 = arith.constant 0 : i32
    %c0_i32_1 = arith.constant 0 : i32
    return %c0_i32, %c0_i32_0 : i32, i32
  }
  func.func @transform_9(%arg0: i32) -> (i32, i32) {
    %c0_i32 = arith.constant 0 : i32
    %c0_i32_0 = arith.constant 0 : i32
    return %arg0, %c0_i32 : i32, i32
  }
}

</mosaic_0001>

<llo_original>
// kernel: conv_tower_forward.2
$region0: #{conv_tower_forward.2}
  #allocation0 [shape = 'u32[]', space=smem, size = 0x4, offset = 0x4, fixed_abs, tag = 'smem constant byte address 0x4 - core index']
  #allocation1 [shape = 'u32[72,128]{1,0:T(1,128)}', space=vmem, size = 0x9000, scoped, tag = 'internal scratch']
  #allocation2 [shape = 'f32[64,8]{1,0:T(8,128)}', space=vmem, size = 0x8000, scoped, tag = 'scratch operand']
  %s0 = inlined_call_operand.vmem [shape: f32[64,8], index: 0, kind: input, shape index: {}]
  %s1 = inlined_call_operand.vmem [shape: f32[1,8], index: 1, kind: input, shape index: {}]
  %s2 = inlined_call_operand.vmem [shape: f32[1,8], index: 2, kind: input, shape index: {}]
  %s3 = inlined_call_operand.vmem [shape: bf16[3,8,8], index: 3, kind: input, shape index: {}]
  %s4 = inlined_call_operand.vmem [shape: f32[1,8], index: 4, kind: input, shape index: {}]
  %s5 = inlined_call_operand.vmem [shape: f32[1,8], index: 5, kind: input, shape index: {}]
  %s6 = inlined_call_operand.vmem [shape: f32[1,8], index: 6, kind: input, shape index: {}]
  %s7 = inlined_call_operand.vmem [shape: bf16[8,8], index: 7, kind: input, shape index: {}]
  %s8 = inlined_call_operand.vmem [shape: f32[1,8], index: 8, kind: input, shape index: {}]
  %s9 = inlined_call_operand.vmem [shape: bf16[32,8], index: 9, kind: output, shape index: {}]
  %s10 = sld [smem:[#allocation0]]
  $region46: #{conv_tower_forward.2} parent=0
    _
  %s12 = ssub.s32 1, %s10
  %s13 = scalar_select 0, %s12, %s10
  // Predicated region
  $region2: #{conv_tower_forward.2} parent=0 // pred_check
    _
  $region3: #{conv_tower_forward.2} parent=0 // pred_check_branch
    %15 = sbr.rel (0) target = $region5
  $region4: #{conv_tower_forward.2} parent=0 // pred_region
    _
  $region5: #{conv_tower_forward.2} parent=0 // pred_fallthru
    _
  // Predicated region
  $region6: #{conv_tower_forward.2} parent=0 // pred_check
    _
  $region7: #{conv_tower_forward.2} parent=0 // pred_check_branch
    %17 = sbr.rel (0) target = $region9
  $region8: #{conv_tower_forward.2} parent=0 // pred_region
    _
  $region9: #{conv_tower_forward.2} parent=0 // pred_fallthru
    _
  // Predicated region
  $region10: #{conv_tower_forward.2} parent=0 // pred_check
    _
  $region11: #{conv_tower_forward.2} parent=0 // pred_check_branch
    %19 = sbr.rel (0) target = $region13
  $region12: #{conv_tower_forward.2} parent=0 // pred_region
    _
  $region13: #{conv_tower_forward.2} parent=0 // pred_fallthru
    _
  // Predicated region
  $region14: #{conv_tower_forward.2} parent=0 // pred_check
    _
  $region15: #{conv_tower_forward.2} parent=0 // pred_check_branch
    %21 = sbr.rel (0) target = $region17
  $region16: #{conv_tower_forward.2} parent=0 // pred_region
    _
  $region17: #{conv_tower_forward.2} parent=0 // pred_fallthru
    _
  // Predicated region
  $region18: #{conv_tower_forward.2} parent=0 // pred_check
    _
  $region19: #{conv_tower_forward.2} parent=0 // pred_check_branch
    %23 = sbr.rel (0) target = $region21
  $region20: #{conv_tower_forward.2} parent=0 // pred_region
    _
  $region21: #{conv_tower_forward.2} parent=0 // pred_fallthru
    _
  // Predicated region
  $region22: #{conv_tower_forward.2} parent=0 // pred_check
    _
  $region23: #{conv_tower_forward.2} parent=0 // pred_check_branch
    %25 = sbr.rel (0) target = $region25
  $region24: #{conv_tower_forward.2} parent=0 // pred_region
    _
  $region25: #{conv_tower_forward.2} parent=0 // pred_fallthru
    _
  // Predicated region
  $region26: #{conv_tower_forward.2} parent=0 // pred_check
    _
  $region27: #{conv_tower_forward.2} parent=0 // pred_check_branch
    %27 = sbr.rel (0) target = $region29
  $region28: #{conv_tower_forward.2} parent=0 // pred_region
    _
  $region29: #{conv_tower_forward.2} parent=0 // pred_fallthru
    _
  // Predicated region
  $region30: #{conv_tower_forward.2} parent=0 // pred_check
    _
  $region31: #{conv_tower_forward.2} parent=0 // pred_check_branch
    %29 = sbr.rel (0) target = $region33
  $region32: #{conv_tower_forward.2} parent=0 // pred_region
    _
  $region33: #{conv_tower_forward.2} parent=0 // pred_fallthru
    _
  // Predicated region
  $region34: #{conv_tower_forward.2} parent=0 // pred_check
    _
  $region35: #{conv_tower_forward.2} parent=0 // pred_check_branch
    %31 = sbr.rel (0) target = $region37
  $region36: #{conv_tower_forward.2} parent=0 // pred_region
    _
  $region37: #{conv_tower_forward.2} parent=0 // pred_fallthru
    _
  %v33 = vld [vmem:[%s0] sm:$0xff]
  %v34 = vld [vmem:[%s0 + $0x8] sm:$0xff]
  %v35 = vld [vmem:[%s0 + $0x10] sm:$0xff]
  %v36 = vld [vmem:[%s0 + $0x18] sm:$0xff]
  %v37 = vld [vmem:[%s0 + $0x20] sm:$0xff]
  %v38 = vld [vmem:[%s0 + $0x28] sm:$0xff]
  %v39 = vld [vmem:[%s0 + $0x30] sm:$0xff]
  %v40 = vld [vmem:[%s0 + $0x38] sm:$0xff]
  %v41 = vld [vmem:[%s1] sm:$0x1]
  %v43 = vperm.slane %v41, 0
  %v45 = vmul.f32 %v33, %v43
  %v46 = vmul.f32 %v34, %v43
  %v47 = vmul.f32 %v35, %v43
  %v48 = vmul.f32 %v36, %v43
  %v49 = vmul.f32 %v37, %v43
  %v50 = vmul.f32 %v38, %v43
  %v51 = vmul.f32 %v39, %v43
  %v52 = vmul.f32 %v40, %v43
  %v53 = vld [vmem:[%s2] sm:$0x1]
  %v55 = vperm.slane %v53, 0
  %v57 = vadd.f32 %v45, %v55
  %v58 = vadd.f32 %v46, %v55
  %v59 = vadd.f32 %v47, %v55
  %v60 = vadd.f32 %v48, %v55
  %v61 = vadd.f32 %v49, %v55
  %v62 = vadd.f32 %v50, %v55
  %v63 = vadd.f32 %v51, %v55
  %v64 = vadd.f32 %v52, %v55
  %v65 = vmul.f32 %v57, 0.5
  %v66 = vmul.f32 %v58, 0.5
  %v67 = vmul.f32 %v59, 0.5
  %v68 = vmul.f32 %v60, 0.5
  %v69 = vmul.f32 %v61, 0.5
  %v70 = vmul.f32 %v62, 0.5
  %v71 = vmul.f32 %v63, 0.5
  %v72 = vmul.f32 %v64, 0.5
  %v73 = vmul.f32 %v57, 0.044715
  %v74 = vmul.f32 %v58, 0.044715
  %v75 = vmul.f32 %v59, 0.044715
  %v76 = vmul.f32 %v60, 0.044715
  %v77 = vmul.f32 %v61, 0.044715
  %v78 = vmul.f32 %v62, 0.044715
  %v79 = vmul.f32 %v63, 0.044715
  %v80 = vmul.f32 %v64, 0.044715
  %v81 = vmul.f32 %v73, %v57
  %v82 = vmul.f32 %v74, %v58
  %v83 = vmul.f32 %v75, %v59
  %v84 = vmul.f32 %v76, %v60
  %v85 = vmul.f32 %v77, %v61
  %v86 = vmul.f32 %v78, %v62
  %v87 = vmul.f32 %v79, %v63
  %v88 = vmul.f32 %v80, %v64
  %v89 = vmul.f32 %v81, %v57
  %v90 = vmul.f32 %v82, %v58
  %v91 = vmul.f32 %v83, %v59
  %v92 = vmul.f32 %v84, %v60
  %v93 = vmul.f32 %v85, %v61
  %v94 = vmul.f32 %v86, %v62
  %v95 = vmul.f32 %v87, %v63
  %v96 = vmul.f32 %v88, %v64
  %v97 = vadd.f32 %v57, %v89
  %v98 = vadd.f32 %v58, %v90
  %v99 = vadd.f32 %v59, %v91
  %v100 = vadd.f32 %v60, %v92
  %v101 = vadd.f32 %v61, %v93
  %v102 = vadd.f32 %v62, %v94
  %v103 = vadd.f32 %v63, %v95
  %v104 = vadd.f32 %v64, %v96
  %v105 = vmul.f32 %v97, 0.7978846
  %v106 = vmul.f32 %v98, 0.7978846
  %v107 = vmul.f32 %v99, 0.7978846
  %v108 = vmul.f32 %v100, 0.7978846
  %v109 = vmul.f32 %v101, 0.7978846
  %v110 = vmul.f32 %v102, 0.7978846
  %v111 = vmul.f32 %v103, 0.7978846
  %v112 = vmul.f32 %v104, 0.7978846
  %v113 = vtanh.pop %v105
  %v114 = vtanh.pop %v106
  %v115 = vtanh.pop %v107
  %v116 = vtanh.pop %v108
  %v117 = vtanh.pop %v109
  %v118 = vtanh.pop %v110
  %v119 = vtanh.pop %v111
  %v120 = vtanh.pop %v112
  %v121 = vadd.f32 %v113, 1.0
  %v122 = vadd.f32 %v114, 1.0
  %v123 = vadd.f32 %v115, 1.0
  %v124 = vadd.f32 %v116, 1.0
  %v125 = vadd.f32 %v117, 1.0
  %v126 = vadd.f32 %v118, 1.0
  %v127 = vadd.f32 %v119, 1.0
  %v128 = vadd.f32 %v120, 1.0
  %v129 = vmul.f32 %v65, %v121
  %v130 = vmul.f32 %v66, %v122
  %v131 = vmul.f32 %v67, %v123
  %v132 = vmul.f32 %v68, %v124
  %v133 = vmul.f32 %v69, %v125
  %v134 = vmul.f32 %v70, %v126
  %v135 = vmul.f32 %v71, %v127
  %v136 = vmul.f32 %v72, %v128
  %v137 = vlaneseq
  %v138 = vshrl.u32 %v137, 7
  %v139 = vadd.s32 %v138, 8
  %v140 = vadd.s32 %v138, 16
  %v141 = vadd.s32 %v138, 24
  %v142 = vadd.s32 %v138, 32
  %v143 = vadd.s32 %v138, 40
  %v144 = vadd.s32 %v138, 48
  %v145 = vadd.s32 %v138, 56
  %vm146 = vcmp.lt.s32.totalorder %v138, 0
  %v147 = vsub.s32 0, %v138
  %v148 = vsel %vm146, %v147, %v138
  %v149 = vshrl.u32 %v148, 5
  %v150 = vand.u32 %v148, 31
  %v151 = vsub.s32 0, %v150
  %v152 = vsel %vm146, %v151, %v150
  %vm153 = vcmp.lt.s32.totalorder %v139, 0
  %v154 = vsub.s32 0, %v139
  %v155 = vsel %vm153, %v154, %v139
  %v156 = vshrl.u32 %v155, 5
  %v157 = vand.u32 %v155, 31
  %v158 = vsub.s32 0, %v157
  %v159 = vsel %vm153, %v158, %v157
  %vm160 = vcmp.lt.s32.totalorder %v140, 0
  %v161 = vsub.s32 0, %v140
  %v162 = vsel %vm160, %v161, %v140
  %v163 = vshrl.u32 %v162, 5
  %v164 = vand.u32 %v162, 31
  %v165 = vsub.s32 0, %v164
  %v166 = vsel %vm160, %v165, %v164
  %vm167 = vcmp.lt.s32.totalorder %v141, 0
  %v168 = vsub.s32 0, %v141
  %v169 = vsel %vm167, %v168, %v141
  %v170 = vshrl.u32 %v169, 5
  %v171 = vand.u32 %v169, 31
  %v172 = vsub.s32 0, %v171
  %v173 = vsel %vm167, %v172, %v171
  %vm174 = vcmp.lt.s32.totalorder %v142, 0
  %v175 = vsub.s32 0, %v142
  %v176 = vsel %vm174, %v175, %v142
  %v177 = vshrl.u32 %v176, 5
  %v178 = vand.u32 %v176, 31
  %v179 = vsub.s32 0, %v178
  %v180 = vsel %vm174, %v179, %v178
  %vm181 = vcmp.lt.s32.totalorder %v143, 0
  %v182 = vsub.s32 0, %v143
  %v183 = vsel %vm181, %v182, %v143
  %v184 = vshrl.u32 %v183, 5
  %v185 = vand.u32 %v183, 31
  %v186 = vsub.s32 0, %v185
  %v187 = vsel %vm181, %v186, %v185
  %vm188 = vcmp.lt.s32.totalorder %v144, 0
  %v189 = vsub.s32 0, %v144
  %v190 = vsel %vm188, %v189, %v144
  %v191 = vshrl.u32 %v190, 5
  %v192 = vand.u32 %v190, 31
  %v193 = vsub.s32 0, %v192
  %v194 = vsel %vm188, %v193, %v192
  %vm195 = vcmp.lt.s32.totalorder %v145, 0
  %v196 = vsub.s32 0, %v145
  %v197 = vsel %vm195, %v196, %v145
  %v198 = vshrl.u32 %v197, 5
  %v199 = vand.u32 %v197, 31
  %v200 = vsub.s32 0, %v199
  %v201 = vsel %vm195, %v200, %v199
  %vm202 = vcmp.ne.s32.totalorder %v152, 0
  %vm203 = vcmp.ne.s32.totalorder %v159, 0
  %vm204 = vcmp.ne.s32.totalorder %v166, 0
  %vm205 = vcmp.ne.s32.totalorder %v173, 0
  %vm206 = vcmp.ne.s32.totalorder %v180, 0
  %vm207 = vcmp.ne.s32.totalorder %v187, 0
  %vm208 = vcmp.ne.s32.totalorder %v194, 0
  %vm209 = vcmp.ne.s32.totalorder %v201, 0
  %vm210 = vcmp.lt.s32.totalorder %v152, 0
  %vm211 = vcmp.lt.s32.totalorder %v159, 0
  %vm212 = vcmp.lt.s32.totalorder %v166, 0
  %vm213 = vcmp.lt.s32.totalorder %v173, 0
  %vm214 = vcmp.lt.s32.totalorder %v180, 0
  %vm215 = vcmp.lt.s32.totalorder %v187, 0
  %vm216 = vcmp.lt.s32.totalorder %v194, 0
  %vm217 = vcmp.lt.s32.totalorder %v201, 0
  %vm218 = vmand %vm210, %vm202
  %vm219 = vmand %vm211, %vm203
  %vm220 = vmand %vm212, %vm204
  %vm221 = vmand %vm213, %vm205
  %vm222 = vmand %vm214, %vm206
  %vm223 = vmand %vm215, %vm207
  %vm224 = vmand %vm216, %vm208
  %vm225 = vmand %vm217, %vm209
  %v226 = vadd.s32 %v152, 32
  %v227 = vadd.s32 %v159, 32
  %v228 = vadd.s32 %v166, 32
  %v229 = vadd.s32 %v173, 32
  %v230 = vadd.s32 %v180, 32
  %v231 = vadd.s32 %v187, 32
  %v232 = vadd.s32 %v194, 32
  %v233 = vadd.s32 %v201, 32
  %v234 = vsel %vm218, %v226, %v152
  %v235 = vsel %vm219, %v227, %v159
  %v236 = vsel %vm220, %v228, %v166
  %v237 = vsel %vm221, %v229, %v173
  %v238 = vsel %vm222, %v230, %v180
  %v239 = vsel %vm223, %v231, %v187
  %v240 = vsel %vm224, %v232, %v194
  %v241 = vsel %vm225, %v233, %v201
  %v242 = vld [vmem:[%s4] sm:$0x1]
  %v243 = vrot.slane %v129, 7
  %v244 = vrot.slane %v130, 7
  %v245 = vrot.slane %v131, 7
  %v246 = vrot.slane %v132, 7
  %v247 = vrot.slane %v133, 7
  %v248 = vrot.slane %v134, 7
  %v249 = vrot.slane %v135, 7
  %v250 = vrot.slane %v136, 7
  %vm251 = vcmp.lt.s32.totalorder %v138, 1
  %v252 = vsel %vm251, %v249, %v250
  %v253 = vsel %vm251, %v248, %v249
  %v254 = vsel %vm251, %v247, %v248
  %v255 = vsel %vm251, %v246, %v247
  %v256 = vsel %vm251, %v245, %v246
  %v257 = vsel %vm251, %v244, %v245
  %v258 = vsel %vm251, %v243, %v244
  %v259 = vsel %vm251, %v250, %v243
  %vm260 = vcmp.ge.s32.totalorder %v234, 1
  %vm261 = vcmp.ge.s32.totalorder %v235, 1
  %vm262 = vcmp.ge.s32.totalorder %v236, 1
  %vm263 = vcmp.ge.s32.totalorder %v237, 1
  %vm264 = vcmp.ge.s32.totalorder %v238, 1
  %vm265 = vcmp.ge.s32.totalorder %v239, 1
  %vm266 = vcmp.ge.s32.totalorder %v240, 1
  %vm267 = vcmp.ge.s32.totalorder %v241, 1
  %vm268 = vcmp.lt.s32.totalorder %v234, 33
  %vm269 = vcmp.lt.s32.totalorder %v235, 33
  %vm270 = vcmp.lt.s32.totalorder %v236, 33
  %vm271 = vcmp.lt.s32.totalorder %v237, 33
  %vm272 = vcmp.lt.s32.totalorder %v238, 33
  %vm273 = vcmp.lt.s32.totalorder %v239, 33
  %vm274 = vcmp.lt.s32.totalorder %v240, 33
  %vm275 = vcmp.lt.s32.totalorder %v241, 33
  %vm276 = vmand %vm260, %vm268
  %vm277 = vmand %vm261, %vm269
  %vm278 = vmand %vm262, %vm270
  %vm279 = vmand %vm263, %vm271
  %vm280 = vmand %vm264, %vm272
  %vm281 = vmand %vm265, %vm273
  %vm282 = vmand %vm266, %vm274
  %vm283 = vmand %vm267, %vm275
  %v284 = vsel %vm276, 1, 0
  %v285 = vsel %vm277, 1, 0
  %v286 = vsel %vm278, 1, 0
  %v287 = vsel %vm279, 1, 0
  %v288 = vsel %vm280, 1, 0
  %v289 = vsel %vm281, 1, 0
  %v290 = vsel %vm282, 1, 0
  %v291 = vsel %vm283, 1, 0
  %vm292 = vcmp.eq.s32.totalorder %v284, 1
  %vm293 = vcmp.eq.s32.totalorder %v285, 1
  %vm294 = vcmp.eq.s32.totalorder %v286, 1
  %vm295 = vcmp.eq.s32.totalorder %v287, 1
  %vm296 = vcmp.eq.s32.totalorder %v288, 1
  %vm297 = vcmp.eq.s32.totalorder %v289, 1
  %vm298 = vcmp.eq.s32.totalorder %v290, 1
  %vm299 = vcmp.eq.s32.totalorder %v291, 1
  %v300 = vsel %vm292, %v259, 0.0
  %v301 = vsel %vm293, %v258, 0.0
  %v302 = vsel %vm294, %v257, 0.0
  %v303 = vsel %vm295, %v256, 0.0
  %v304 = vsel %vm296, %v255, 0.0
  %v305 = vsel %vm297, %v254, 0.0
  %v306 = vsel %vm298, %v253, 0.0
  %v307 = vsel %vm299, %v252, 0.0
  %v308 = vpack.c.bf16 %v301, %v300
  %v309 = vpack.c.bf16 %v303, %v302
  %v310 = vpack.c.bf16 %v305, %v304
  %v311 = vpack.c.bf16 %v307, %v306
  %v312 = vld [vmem:[%s3] sm:$0xf]
  %vm313 = vcmask 64512
  %v315 = vsel %vm313, %v308, 0
  %v318 = vsel %vm313, %v309, 0
  %v321 = vsel %vm313, %v310, 0
  %v324 = vsel %vm313, %v311, 0
  %vm326 = vcmask 1043456
  %v328 = vsel %vm326, %v312, 0
  %330 = vmatpush.bf16.msra.mxu0 0
  %331 = vmatpush.bf16.msra.mxu0 0
  %332 = vmatpush.bf16.msra.mxu0 0
  %333 = vmatpush.bf16.msra.mxu0 0
  %334 = vmatpush.bf16.msra.mxu0 0
  %335 = vmatpush.bf16.msra.mxu0 0
  %336 = vmatpush.bf16.msra.mxu0 0
  %337 = vmatpush.bf16.msra.mxu0 %v328
  %338 = vmatmul.bf16.gmra.mxu0 %v315
  %v339 = vpop.f32.mrf.mxu0
  %v340 = vadd.f32 0.0, %v339
  %v341 = vpop.f32.mrf.mxu0
  %v342 = vadd.f32 0.0, %v341
  %343 = vmatmul.bf16.gmra.mxu0 %v318
  %v344 = vpop.f32.mrf.mxu0
  %v345 = vadd.f32 0.0, %v344
  %v346 = vpop.f32.mrf.mxu0
  %v347 = vadd.f32 0.0, %v346
  %348 = vmatmul.bf16.gmra.mxu0 %v321
  %v349 = vpop.f32.mrf.mxu0
  %v350 = vadd.f32 0.0, %v349
  %v351 = vpop.f32.mrf.mxu0
  %v352 = vadd.f32 0.0, %v351
  %353 = vmatmul.bf16.gmra.mxu0 %v324
  %v354 = vpop.f32.mrf.mxu0
  %v355 = vadd.f32 0.0, %v354
  %v356 = vpop.f32.mrf.mxu0
  %v357 = vadd.f32 0.0, %v356
  %358 = vdwg.mxu0
  %v360 = vperm.slane %v242, 0
  %v362 = vadd.f32 %v360, %v340
  %v363 = vadd.f32 %v360, %v342
  %v364 = vadd.f32 %v360, %v345
  %v365 = vadd.f32 %v360, %v347
  %v366 = vadd.f32 %v360, %v350
  %v367 = vadd.f32 %v360, %v352
  %v368 = vadd.f32 %v360, %v355
  %v369 = vadd.f32 %v360, %v357
  %v370 = vpack.c.bf16 %v130, %v129
  %v371 = vpack.c.bf16 %v132, %v131
  %v372 = vpack.c.bf16 %v134, %v133
  %v373 = vpack.c.bf16 %v136, %v135
  %s374 = scalar_lea.vmem %s3, 4
  %v375 = vld [vmem:[%s374] sm:$0xf]
  %v377 = vsel %vm313, %v370, 0
  %v380 = vsel %vm313, %v371, 0
  %v383 = vsel %vm313, %v372, 0
  %v386 = vsel %vm313, %v373, 0
  %v389 = vsel %vm326, %v375, 0
  %391 = vmatpush.bf16.msra.mxu0 0
  %392 = vmatpush.bf16.msra.mxu0 0
  %393 = vmatpush.bf16.msra.mxu0 0
  %394 = vmatpush.bf16.msra.mxu0 0
  %395 = vmatpush.bf16.msra.mxu0 0
  %396 = vmatpush.bf16.msra.mxu0 0
  %397 = vmatpush.bf16.msra.mxu0 0
  %398 = vmatpush.bf16.msra.mxu0 %v389
  %399 = vmatmul.bf16.gmra.mxu0 %v377
  %v400 = vpop.f32.mrf.mxu0
  %v401 = vadd.f32 0.0, %v400
  %v402 = vpop.f32.mrf.mxu0
  %v403 = vadd.f32 0.0, %v402
  %404 = vmatmul.bf16.gmra.mxu0 %v380
  %v405 = vpop.f32.mrf.mxu0
  %v406 = vadd.f32 0.0, %v405
  %v407 = vpop.f32.mrf.mxu0
  %v408 = vadd.f32 0.0, %v407
  %409 = vmatmul.bf16.gmra.mxu0 %v383
  %v410 = vpop.f32.mrf.mxu0
  %v411 = vadd.f32 0.0, %v410
  %v412 = vpop.f32.mrf.mxu0
  %v413 = vadd.f32 0.0, %v412
  %414 = vmatmul.bf16.gmra.mxu0 %v386
  %v415 = vpop.f32.mrf.mxu0
  %v416 = vadd.f32 0.0, %v415
  %v417 = vpop.f32.mrf.mxu0
  %v418 = vadd.f32 0.0, %v417
  %419 = vdwg.mxu0
  %v420 = vadd.f32 %v362, %v401
  %v421 = vadd.f32 %v363, %v403
  %v422 = vadd.f32 %v364, %v406
  %v423 = vadd.f32 %v365, %v408
  %v424 = vadd.f32 %v366, %v411
  %v425 = vadd.f32 %v367, %v413
  %v426 = vadd.f32 %v368, %v416
  %v427 = vadd.f32 %v369, %v418
  %v428 = vrot.slane %v129, 1
  %v429 = vrot.slane %v130, 1
  %v430 = vrot.slane %v131, 1
  %v431 = vrot.slane %v132, 1
  %v432 = vrot.slane %v133, 1
  %v433 = vrot.slane %v134, 1
  %v434 = vrot.slane %v135, 1
  %v435 = vrot.slane %v136, 1
  %vm436 = vcmp.lt.s32.totalorder %v138, 7
  %v437 = vsel %vm436, %v434, %v435
  %v438 = vsel %vm436, %v433, %v434
  %v439 = vsel %vm436, %v432, %v433
  %v440 = vsel %vm436, %v431, %v432
  %v441 = vsel %vm436, %v430, %v431
  %v442 = vsel %vm436, %v429, %v430
  %v443 = vsel %vm436, %v428, %v429
  %v444 = vsel %vm436, %v435, %v428
  %vm445 = vcmp.ge.s32.totalorder %v234, 4294967295
  %vm446 = vcmp.ge.s32.totalorder %v235, 4294967295
  %vm447 = vcmp.ge.s32.totalorder %v236, 4294967295
  %vm448 = vcmp.ge.s32.totalorder %v237, 4294967295
  %vm449 = vcmp.ge.s32.totalorder %v238, 4294967295
  %vm450 = vcmp.ge.s32.totalorder %v239, 4294967295
  %vm451 = vcmp.ge.s32.totalorder %v240, 4294967295
  %vm452 = vcmp.ge.s32.totalorder %v241, 4294967295
  %vm453 = vcmp.lt.s32.totalorder %v234, 31
  %vm454 = vcmp.lt.s32.totalorder %v235, 31
  %vm455 = vcmp.lt.s32.totalorder %v236, 31
  %vm456 = vcmp.lt.s32.totalorder %v237, 31
  %vm457 = vcmp.lt.s32.totalorder %v238, 31
  %vm458 = vcmp.lt.s32.totalorder %v239, 31
  %vm459 = vcmp.lt.s32.totalorder %v240, 31
  %vm460 = vcmp.lt.s32.totalorder %v241, 31
  %vm461 = vmand %vm445, %vm453
  %vm462 = vmand %vm446, %vm454
  %vm463 = vmand %vm447, %vm455
  %vm464 = vmand %vm448, %vm456
  %vm465 = vmand %vm449, %vm457
  %vm466 = vmand %vm450, %vm458
  %vm467 = vmand %vm451, %vm459
  %vm468 = vmand %vm452, %vm460
  %v469 = vsel %vm461, 1, 0
  %v470 = vsel %vm462, 1, 0
  %v471 = vsel %vm463, 1, 0
  %v472 = vsel %vm464, 1, 0
  %v473 = vsel %vm465, 1, 0
  %v474 = vsel %vm466, 1, 0
  %v475 = vsel %vm467, 1, 0
  %v476 = vsel %vm468, 1, 0
  %vm477 = vcmp.eq.s32.totalorder %v469, 1
  %vm478 = vcmp.eq.s32.totalorder %v470, 1
  %vm479 = vcmp.eq.s32.totalorder %v471, 1
  %vm480 = vcmp.eq.s32.totalorder %v472, 1
  %vm481 = vcmp.eq.s32.totalorder %v473, 1
  %vm482 = vcmp.eq.s32.totalorder %v474, 1
  %vm483 = vcmp.eq.s32.totalorder %v475, 1
  %vm484 = vcmp.eq.s32.totalorder %v476, 1
  %v485 = vsel %vm477, %v443, 0.0
  %v486 = vsel %vm478, %v442, 0.0
  %v487 = vsel %vm479, %v441, 0.0
  %v488 = vsel %vm480, %v440, 0.0
  %v489 = vsel %vm481, %v439, 0.0
  %v490 = vsel %vm482, %v438, 0.0
  %v491 = vsel %vm483, %v437, 0.0
  %v492 = vsel %vm484, %v444, 0.0
  %v493 = vpack.c.bf16 %v486, %v485
  %v494 = vpack.c.bf16 %v488, %v487
  %v495 = vpack.c.bf16 %v490, %v489
  %v496 = vpack.c.bf16 %v492, %v491
  %s497 = scalar_lea.vmem %s3, 8
  %v498 = vld [vmem:[%s497] sm:$0xf]
  %v500 = vsel %vm313, %v493, 0
  %v503 = vsel %vm313, %v494, 0
  %v506 = vsel %vm313, %v495, 0
  %v509 = vsel %vm313, %v496, 0
  %v512 = vsel %vm326, %v498, 0
  %514 = vmatpush.bf16.msra.mxu0 0
  %515 = vmatpush.bf16.msra.mxu0 0
  %516 = vmatpush.bf16.msra.mxu0 0
  %517 = vmatpush.bf16.msra.mxu0 0
  %518 = vmatpush.bf16.msra.mxu0 0
  %519 = vmatpush.bf16.msra.mxu0 0
  %520 = vmatpush.bf16.msra.mxu0 0
  %521 = vmatpush.bf16.msra.mxu0 %v512
  %522 = vmatmul.bf16.gmra.mxu0 %v500
  %v523 = vpop.f32.mrf.mxu0
  %v524 = vadd.f32 0.0, %v523
  %v525 = vpop.f32.mrf.mxu0
  %v526 = vadd.f32 0.0, %v525
  %527 = vmatmul.bf16.gmra.mxu0 %v503
  %v528 = vpop.f32.mrf.mxu0
  %v529 = vadd.f32 0.0, %v528
  %v530 = vpop.f32.mrf.mxu0
  %v531 = vadd.f32 0.0, %v530
  %532 = vmatmul.bf16.gmra.mxu0 %v506
  %v533 = vpop.f32.mrf.mxu0
  %v534 = vadd.f32 0.0, %v533
  %v535 = vpop.f32.mrf.mxu0
  %v536 = vadd.f32 0.0, %v535
  %537 = vmatmul.bf16.gmra.mxu0 %v509
  %v538 = vpop.f32.mrf.mxu0
  %v539 = vadd.f32 0.0, %v538
  %v540 = vpop.f32.mrf.mxu0
  %v541 = vadd.f32 0.0, %v540
  %542 = vdwg.mxu0
  %v543 = vadd.f32 %v420, %v524
  %v544 = vadd.f32 %v421, %v526
  %v545 = vadd.f32 %v422, %v529
  %v546 = vadd.f32 %v423, %v531
  %v547 = vadd.f32 %v424, %v534
  %v548 = vadd.f32 %v425, %v536
  %v549 = vadd.f32 %v426, %v539
  %v550 = vadd.f32 %v427, %v541
  %v551 = vld [vmem:[%s5] sm:$0x1]
  %v553 = vperm.slane %v551, 0
  %v555 = vmul.f32 %v543, %v553
  %v556 = vmul.f32 %v544, %v553
  %v557 = vmul.f32 %v545, %v553
  %v558 = vmul.f32 %v546, %v553
  %v559 = vmul.f32 %v547, %v553
  %v560 = vmul.f32 %v548, %v553
  %v561 = vmul.f32 %v549, %v553
  %v562 = vmul.f32 %v550, %v553
  %v563 = vld [vmem:[%s6] sm:$0x1]
  %v565 = vperm.slane %v563, 0
  %v567 = vadd.f32 %v555, %v565
  %v568 = vadd.f32 %v556, %v565
  %v569 = vadd.f32 %v557, %v565
  %v570 = vadd.f32 %v558, %v565
  %v571 = vadd.f32 %v559, %v565
  %v572 = vadd.f32 %v560, %v565
  %v573 = vadd.f32 %v561, %v565
  %v574 = vadd.f32 %v562, %v565
  %v575 = vmul.f32 %v567, 0.5
  %v576 = vmul.f32 %v568, 0.5
  %v577 = vmul.f32 %v569, 0.5
  %v578 = vmul.f32 %v570, 0.5
  %v579 = vmul.f32 %v571, 0.5
  %v580 = vmul.f32 %v572, 0.5
  %v581 = vmul.f32 %v573, 0.5
  %v582 = vmul.f32 %v574, 0.5
  %v583 = vmul.f32 %v567, 0.044715
  %v584 = vmul.f32 %v568, 0.044715
  %v585 = vmul.f32 %v569, 0.044715
  %v586 = vmul.f32 %v570, 0.044715
  %v587 = vmul.f32 %v571, 0.044715
  %v588 = vmul.f32 %v572, 0.044715
  %v589 = vmul.f32 %v573, 0.044715
  %v590 = vmul.f32 %v574, 0.044715
  %v591 = vmul.f32 %v583, %v567
  %v592 = vmul.f32 %v584, %v568
  %v593 = vmul.f32 %v585, %v569
  %v594 = vmul.f32 %v586, %v570
  %v595 = vmul.f32 %v587, %v571
  %v596 = vmul.f32 %v588, %v572
  %v597 = vmul.f32 %v589, %v573
  %v598 = vmul.f32 %v590, %v574
  %v599 = vmul.f32 %v591, %v567
  %v600 = vmul.f32 %v592, %v568
  %v601 = vmul.f32 %v593, %v569
  %v602 = vmul.f32 %v594, %v570
  %v603 = vmul.f32 %v595, %v571
  %v604 = vmul.f32 %v596, %v572
  %v605 = vmul.f32 %v597, %v573
  %v606 = vmul.f32 %v598, %v574
  %v607 = vadd.f32 %v567, %v599
  %v608 = vadd.f32 %v568, %v600
  %v609 = vadd.f32 %v569, %v601
  %v610 = vadd.f32 %v570, %v602
  %v611 = vadd.f32 %v571, %v603
  %v612 = vadd.f32 %v572, %v604
  %v613 = vadd.f32 %v573, %v605
  %v614 = vadd.f32 %v574, %v606
  %v615 = vmul.f32 %v607, 0.7978846
  %v616 = vmul.f32 %v608, 0.7978846
  %v617 = vmul.f32 %v609, 0.7978846
  %v618 = vmul.f32 %v610, 0.7978846
  %v619 = vmul.f32 %v611, 0.7978846
  %v620 = vmul.f32 %v612, 0.7978846
  %v621 = vmul.f32 %v613, 0.7978846
  %v622 = vmul.f32 %v614, 0.7978846
  %v623 = vtanh.pop %v615
  %v624 = vtanh.pop %v616
  %v625 = vtanh.pop %v617
  %v626 = vtanh.pop %v618
  %v627 = vtanh.pop %v619
  %v628 = vtanh.pop %v620
  %v629 = vtanh.pop %v621
  %v630 = vtanh.pop %v622
  %v631 = vadd.f32 %v623, 1.0
  %v632 = vadd.f32 %v624, 1.0
  %v633 = vadd.f32 %v625, 1.0
  %v634 = vadd.f32 %v626, 1.0
  %v635 = vadd.f32 %v627, 1.0
  %v636 = vadd.f32 %v628, 1.0
  %v637 = vadd.f32 %v629, 1.0
  %v638 = vadd.f32 %v630, 1.0
  %v639 = vmul.f32 %v575, %v631
  %v640 = vmul.f32 %v576, %v632
  %v641 = vmul.f32 %v577, %v633
  %v642 = vmul.f32 %v578, %v634
  %v643 = vmul.f32 %v579, %v635
  %v644 = vmul.f32 %v580, %v636
  %v645 = vmul.f32 %v581, %v637
  %v646 = vmul.f32 %v582, %v638
  %v647 = vpack.c.bf16 %v640, %v639
  %v648 = vpack.c.bf16 %v642, %v641
  %v649 = vpack.c.bf16 %v644, %v643
  %v650 = vpack.c.bf16 %v646, %v645
  %v651 = vld [vmem:[%s7] sm:$0xf]
  %v652 = vld [vmem:[%s8] sm:$0x1]
  %v654 = vperm.slane %v652, 0
  %v657 = vsel %vm313, %v647, 0
  %v660 = vsel %vm313, %v648, 0
  %v663 = vsel %vm313, %v649, 0
  %v666 = vsel %vm313, %v650, 0
  %v669 = vsel %vm326, %v651, 0
  %671 = vmatpush.bf16.msra.mxu0 0
  %672 = vmatpush.bf16.msra.mxu0 0
  %673 = vmatpush.bf16.msra.mxu0 0
  %674 = vmatpush.bf16.msra.mxu0 0
  %675 = vmatpush.bf16.msra.mxu0 0
  %676 = vmatpush.bf16.msra.mxu0 0
  %677 = vmatpush.bf16.msra.mxu0 0
  %678 = vmatpush.bf16.msra.mxu0 %v669
  %679 = vmatmul.bf16.gmra.mxu0 %v657
  %v680 = vpop.f32.mrf.mxu0
  %v681 = vadd.f32 %v654, %v680
  %v682 = vpop.f32.mrf.mxu0
  %v683 = vadd.f32 %v654, %v682
  %684 = vmatmul.bf16.gmra.mxu0 %v660
  %v685 = vpop.f32.mrf.mxu0
  %v686 = vadd.f32 %v654, %v685
  %v687 = vpop.f32.mrf.mxu0
  %v688 = vadd.f32 %v654, %v687
  %689 = vmatmul.bf16.gmra.mxu0 %v663
  %v690 = vpop.f32.mrf.mxu0
  %v691 = vadd.f32 %v654, %v690
  %v692 = vpop.f32.mrf.mxu0
  %v693 = vadd.f32 %v654, %v692
  %694 = vmatmul.bf16.gmra.mxu0 %v666
  %v695 = vpop.f32.mrf.mxu0
  %v696 = vadd.f32 %v654, %v695
  %v697 = vpop.f32.mrf.mxu0
  %v698 = vadd.f32 %v654, %v697
  %699 = vdwg.mxu0
  %v700 = vadd.f32 %v681, %v543
  %v701 = vadd.f32 %v683, %v544
  %v702 = vadd.f32 %v686, %v545
  %v703 = vadd.f32 %v688, %v546
  %v704 = vadd.f32 %v691, %v547
  %v705 = vadd.f32 %v693, %v548
  %v706 = vadd.f32 %v696, %v549
  %v707 = vadd.f32 %v698, %v550
  %708 = vst.msk [vmem:[#allocation2] sm:$0xff] %vm313, %v700
  %709 = vst.msk [vmem:[#allocation2 + $0x8] sm:$0xff] %vm313, %v701
  %710 = vst.msk [vmem:[#allocation2 + $0x10] sm:$0xff] %vm313, %v702
  %711 = vst.msk [vmem:[#allocation2 + $0x18] sm:$0xff] %vm313, %v703
  %712 = vst.msk [vmem:[#allocation2 + $0x20] sm:$0xff] %vm313, %v704
  %713 = vst.msk [vmem:[#allocation2 + $0x28] sm:$0xff] %vm313, %v705
  %714 = vst.msk [vmem:[#allocation2 + $0x30] sm:$0xff] %vm313, %v706
  %715 = vst.msk [vmem:[#allocation2 + $0x38] sm:$0xff] %vm313, %v707
  %v716 = vld [vmem:[#allocation2] ss:$2 sm:$0xff]
  %s717 = scalar_lea.vmem [#allocation2], 16
  %v718 = vld [vmem:[%s717] ss:$2 sm:$0xff]
  %s719 = scalar_lea.vmem [#allocation2], 32
  %v720 = vld [vmem:[%s719] ss:$2 sm:$0xff]
  %s721 = scalar_lea.vmem [#allocation2], 48
  %v722 = vld [vmem:[%s721] ss:$2 sm:$0xff]
  %s723 = scalar_lea.vmem [#allocation2], 1
  %v724 = vld [vmem:[%s723] ss:$2 sm:$0xff]
  %s725 = scalar_lea.vmem [#allocation2], 17
  %v726 = vld [vmem:[%s725] ss:$2 sm:$0xff]
  %s727 = scalar_lea.vmem [#allocation2], 33
  %v728 = vld [vmem:[%s727] ss:$2 sm:$0xff]
  %s729 = scalar_lea.vmem [#allocation2], 49
  %v730 = vld [vmem:[%s729] ss:$2 sm:$0xff]
  %v731 = vmax.f32 %v716, %v724
  %v732 = vmax.f32 %v718, %v726
  %v733 = vmax.f32 %v720, %v728
  %v734 = vmax.f32 %v722, %v730
  %v735 = vpack.c.bf16 %v731, %v731
  %v736 = vpack.c.bf16 %v732, %v732
  %v737 = vpack.c.bf16 %v733, %v733
  %v738 = vpack.c.bf16 %v734, %v734
  %vm739 = vcmask 60416
  %740 = vst.msk [vmem:[%s9] sm:$0xf] %vm739, %v735
  %741 = vst.msk [vmem:[%s9 + $0x4] sm:$0xf] %vm739, %v736
  %742 = vst.msk [vmem:[%s9 + $0x8] sm:$0xf] %vm739, %v737
  %743 = vst.msk [vmem:[%s9 + $0xc] sm:$0xf] %vm739, %v738
  // Predicated region
  $region38: #{conv_tower_forward.2} parent=0 // pred_check
    _
  $region39: #{conv_tower_forward.2} parent=0 // pred_check_branch
    %745 = sbr.rel (0) target = $region41
  $region40: #{conv_tower_forward.2} parent=0 // pred_region
    _
  $region41: #{conv_tower_forward.2} parent=0 // pred_fallthru
    _
  // Predicated region
  $region42: #{conv_tower_forward.2} parent=0 // pred_check
    _
  $region43: #{conv_tower_forward.2} parent=0 // pred_check_branch
    %747 = sbr.rel (0) target = $region45
  $region44: #{conv_tower_forward.2} parent=0 // pred_region
    _
  $region45: #{conv_tower_forward.2} parent=0 // pred_fallthru
    _

// kernel: conv_tower_forward.3
$region0: #{conv_tower_forward.3}
  #allocation0 [shape = 'u32[]', space=smem, size = 0x4, offset = 0x4, fixed_abs, tag = 'smem constant byte address 0x4 - core index']
  #allocation1 [shape = 'u32[72,128]{1,0:T(1,128)}', space=vmem, size = 0x9000, scoped, tag = 'internal scratch']
  #allocation2 [shape = 'f32[32,8]{1,0:T(8,128)}', space=vmem, size = 0x4000, scoped, tag = 'scratch operand']
  %s0 = inlined_call_operand.vmem [shape: bf16[32,8], index: 0, kind: input, shape index: {}]
  %s1 = inlined_call_operand.vmem [shape: f32[1,8], index: 1, kind: input, shape index: {}]
  %s2 = inlined_call_operand.vmem [shape: f32[1,8], index: 2, kind: input, shape index: {}]
  %s3 = inlined_call_operand.vmem [shape: bf16[3,8,8], index: 3, kind: input, shape index: {}]
  %s4 = inlined_call_operand.vmem [shape: f32[1,8], index: 4, kind: input, shape index: {}]
  %s5 = inlined_call_operand.vmem [shape: f32[1,8], index: 5, kind: input, shape index: {}]
  %s6 = inlined_call_operand.vmem [shape: f32[1,8], index: 6, kind: input, shape index: {}]
  %s7 = inlined_call_operand.vmem [shape: bf16[8,8], index: 7, kind: input, shape index: {}]
  %s8 = inlined_call_operand.vmem [shape: f32[1,8], index: 8, kind: input, shape index: {}]
  %s9 = inlined_call_operand.vmem [shape: bf16[16,8], index: 9, kind: output, shape index: {}]
  %s10 = sld [smem:[#allocation0]]
  $region46: #{conv_tower_forward.3} parent=0
    _
  %s12 = ssub.s32 1, %s10
  %s13 = scalar_select 0, %s12, %s10
  // Predicated region
  $region2: #{conv_tower_forward.3} parent=0 // pred_check
    _
  $region3: #{conv_tower_forward.3} parent=0 // pred_check_branch
    %15 = sbr.rel (0) target = $region5
  $region4: #{conv_tower_forward.3} parent=0 // pred_region
    _
  $region5: #{conv_tower_forward.3} parent=0 // pred_fallthru
    _
  // Predicated region
  $region6: #{conv_tower_forward.3} parent=0 // pred_check
    _
  $region7: #{conv_tower_forward.3} parent=0 // pred_check_branch
    %17 = sbr.rel (0) target = $region9
  $region8: #{conv_tower_forward.3} parent=0 // pred_region
    _
  $region9: #{conv_tower_forward.3} parent=0 // pred_fallthru
    _
  // Predicated region
  $region10: #{conv_tower_forward.3} parent=0 // pred_check
    _
  $region11: #{conv_tower_forward.3} parent=0 // pred_check_branch
    %19 = sbr.rel (0) target = $region13
  $region12: #{conv_tower_forward.3} parent=0 // pred_region
    _
  $region13: #{conv_tower_forward.3} parent=0 // pred_fallthru
    _
  // Predicated region
  $region14: #{conv_tower_forward.3} parent=0 // pred_check
    _
  $region15: #{conv_tower_forward.3} parent=0 // pred_check_branch
    %21 = sbr.rel (0) target = $region17
  $region16: #{conv_tower_forward.3} parent=0 // pred_region
    _
  $region17: #{conv_tower_forward.3} parent=0 // pred_fallthru
    _
  // Predicated region
  $region18: #{conv_tower_forward.3} parent=0 // pred_check
    _
  $region19: #{conv_tower_forward.3} parent=0 // pred_check_branch
    %23 = sbr.rel (0) target = $region21
  $region20: #{conv_tower_forward.3} parent=0 // pred_region
    _
  $region21: #{conv_tower_forward.3} parent=0 // pred_fallthru
    _
  // Predicated region
  $region22: #{conv_tower_forward.3} parent=0 // pred_check
    _
  $region23: #{conv_tower_forward.3} parent=0 // pred_check_branch
    %25 = sbr.rel (0) target = $region25
  $region24: #{conv_tower_forward.3} parent=0 // pred_region
    _
  $region25: #{conv_tower_forward.3} parent=0 // pred_fallthru
    _
  // Predicated region
  $region26: #{conv_tower_forward.3} parent=0 // pred_check
    _
  $region27: #{conv_tower_forward.3} parent=0 // pred_check_branch
    %27 = sbr.rel (0) target = $region29
  $region28: #{conv_tower_forward.3} parent=0 // pred_region
    _
  $region29: #{conv_tower_forward.3} parent=0 // pred_fallthru
    _
  // Predicated region
  $region30: #{conv_tower_forward.3} parent=0 // pred_check
    _
  $region31: #{conv_tower_forward.3} parent=0 // pred_check_branch
    %29 = sbr.rel (0) target = $region33
  $region32: #{conv_tower_forward.3} parent=0 // pred_region
    _
  $region33: #{conv_tower_forward.3} parent=0 // pred_fallthru
    _
  // Predicated region
  $region34: #{conv_tower_forward.3} parent=0 // pred_check
    _
  $region35: #{conv_tower_forward.3} parent=0 // pred_check_branch
    %31 = sbr.rel (0) target = $region37
  $region36: #{conv_tower_forward.3} parent=0 // pred_region
    _
  $region37: #{conv_tower_forward.3} parent=0 // pred_fallthru
    _
  %v33 = vld [vmem:[%s0] sm:$0xf]
  %v34 = vld [vmem:[%s0 + $0x4] sm:$0xf]
  %v35 = vld [vmem:[%s0 + $0x8] sm:$0xf]
  %v36 = vld [vmem:[%s0 + $0xc] sm:$0xf]
  %v37 = vunpack.c.l.bf16 %v33
  %v38 = vunpack.c.l.bf16 %v34
  %v39 = vunpack.c.l.bf16 %v35
  %v40 = vunpack.c.l.bf16 %v36
  %v41 = vld [vmem:[%s1] sm:$0x1]
  %v43 = vperm.slane %v41, 0
  %v45 = vmul.f32 %v37, %v43
  %v46 = vmul.f32 %v38, %v43
  %v47 = vmul.f32 %v39, %v43
  %v48 = vmul.f32 %v40, %v43
  %v49 = vld [vmem:[%s2] sm:$0x1]
  %v51 = vperm.slane %v49, 0
  %v53 = vadd.f32 %v45, %v51
  %v54 = vadd.f32 %v46, %v51
  %v55 = vadd.f32 %v47, %v51
  %v56 = vadd.f32 %v48, %v51
  %v57 = vmul.f32 %v53, 0.5
  %v58 = vmul.f32 %v54, 0.5
  %v59 = vmul.f32 %v55, 0.5
  %v60 = vmul.f32 %v56, 0.5
  %v61 = vmul.f32 %v53, 0.044715
  %v62 = vmul.f32 %v54, 0.044715
  %v63 = vmul.f32 %v55, 0.044715
  %v64 = vmul.f32 %v56, 0.044715
  %v65 = vmul.f32 %v61, %v53
  %v66 = vmul.f32 %v62, %v54
  %v67 = vmul.f32 %v63, %v55
  %v68 = vmul.f32 %v64, %v56
  %v69 = vmul.f32 %v65, %v53
  %v70 = vmul.f32 %v66, %v54
  %v71 = vmul.f32 %v67, %v55
  %v72 = vmul.f32 %v68, %v56
  %v73 = vadd.f32 %v53, %v69
  %v74 = vadd.f32 %v54, %v70
  %v75 = vadd.f32 %v55, %v71
  %v76 = vadd.f32 %v56, %v72
  %v77 = vmul.f32 %v73, 0.7978846
  %v78 = vmul.f32 %v74, 0.7978846
  %v79 = vmul.f32 %v75, 0.7978846
  %v80 = vmul.f32 %v76, 0.7978846
  %v81 = vtanh.pop %v77
  %v82 = vtanh.pop %v78
  %v83 = vtanh.pop %v79
  %v84 = vtanh.pop %v80
  %v85 = vadd.f32 %v81, 1.0
  %v86 = vadd.f32 %v82, 1.0
  %v87 = vadd.f32 %v83, 1.0
  %v88 = vadd.f32 %v84, 1.0
  %v89 = vmul.f32 %v57, %v85
  %v90 = vmul.f32 %v58, %v86
  %v91 = vmul.f32 %v59, %v87
  %v92 = vmul.f32 %v60, %v88
  %v93 = vlaneseq
  %v94 = vshrl.u32 %v93, 7
  %v95 = vadd.s32 %v94, 8
  %v96 = vadd.s32 %v94, 16
  %v97 = vadd.s32 %v94, 24
  %vm98 = vcmp.lt.s32.totalorder %v94, 0
  %v99 = vsub.s32 0, %v94
  %v100 = vsel %vm98, %v99, %v94
  %v101 = vshrl.u32 %v100, 4
  %v102 = vand.u32 %v100, 15
  %v103 = vsub.s32 0, %v102
  %v104 = vsel %vm98, %v103, %v102
  %vm105 = vcmp.lt.s32.totalorder %v95, 0
  %v106 = vsub.s32 0, %v95
  %v107 = vsel %vm105, %v106, %v95
  %v108 = vshrl.u32 %v107, 4
  %v109 = vand.u32 %v107, 15
  %v110 = vsub.s32 0, %v109
  %v111 = vsel %vm105, %v110, %v109
  %vm112 = vcmp.lt.s32.totalorder %v96, 0
  %v113 = vsub.s32 0, %v96
  %v114 = vsel %vm112, %v113, %v96
  %v115 = vshrl.u32 %v114, 4
  %v116 = vand.u32 %v114, 15
  %v117 = vsub.s32 0, %v116
  %v118 = vsel %vm112, %v117, %v116
  %vm119 = vcmp.lt.s32.totalorder %v97, 0
  %v120 = vsub.s32 0, %v97
  %v121 = vsel %vm119, %v120, %v97
  %v122 = vshrl.u32 %v121, 4
  %v123 = vand.u32 %v121, 15
  %v124 = vsub.s32 0, %v123
  %v125 = vsel %vm119, %v124, %v123
  %vm126 = vcmp.ne.s32.totalorder %v104, 0
  %vm127 = vcmp.ne.s32.totalorder %v111, 0
  %vm128 = vcmp.ne.s32.totalorder %v118, 0
  %vm129 = vcmp.ne.s32.totalorder %v125, 0
  %vm130 = vcmp.lt.s32.totalorder %v104, 0
  %vm131 = vcmp.lt.s32.totalorder %v111, 0
  %vm132 = vcmp.lt.s32.totalorder %v118, 0
  %vm133 = vcmp.lt.s32.totalorder %v125, 0
  %vm134 = vmand %vm130, %vm126
  %vm135 = vmand %vm131, %vm127
  %vm136 = vmand %vm132, %vm128
  %vm137 = vmand %vm133, %vm129
  %v138 = vadd.s32 %v104, 16
  %v139 = vadd.s32 %v111, 16
  %v140 = vadd.s32 %v118, 16
  %v141 = vadd.s32 %v125, 16
  %v142 = vsel %vm134, %v138, %v104
  %v143 = vsel %vm135, %v139, %v111
  %v144 = vsel %vm136, %v140, %v118
  %v145 = vsel %vm137, %v141, %v125
  %v146 = vld [vmem:[%s4] sm:$0x1]
  %v147 = vrot.slane %v89, 7
  %v148 = vrot.slane %v90, 7
  %v149 = vrot.slane %v91, 7
  %v150 = vrot.slane %v92, 7
  %vm151 = vcmp.lt.s32.totalorder %v94, 1
  %v152 = vsel %vm151, %v149, %v150
  %v153 = vsel %vm151, %v148, %v149
  %v154 = vsel %vm151, %v147, %v148
  %v155 = vsel %vm151, %v150, %v147
  %vm156 = vcmp.ge.s32.totalorder %v142, 1
  %vm157 = vcmp.ge.s32.totalorder %v143, 1
  %vm158 = vcmp.ge.s32.totalorder %v144, 1
  %vm159 = vcmp.ge.s32.totalorder %v145, 1
  %vm160 = vcmp.lt.s32.totalorder %v142, 17
  %vm161 = vcmp.lt.s32.totalorder %v143, 17
  %vm162 = vcmp.lt.s32.totalorder %v144, 17
  %vm163 = vcmp.lt.s32.totalorder %v145, 17
  %vm164 = vmand %vm156, %vm160
  %vm165 = vmand %vm157, %vm161
  %vm166 = vmand %vm158, %vm162
  %vm167 = vmand %vm159, %vm163
  %v168 = vsel %vm164, 1, 0
  %v169 = vsel %vm165, 1, 0
  %v170 = vsel %vm166, 1, 0
  %v171 = vsel %vm167, 1, 0
  %vm172 = vcmp.eq.s32.totalorder %v168, 1
  %vm173 = vcmp.eq.s32.totalorder %v169, 1
  %vm174 = vcmp.eq.s32.totalorder %v170, 1
  %vm175 = vcmp.eq.s32.totalorder %v171, 1
  %v176 = vsel %vm172, %v155, 0.0
  %v177 = vsel %vm173, %v154, 0.0
  %v178 = vsel %vm174, %v153, 0.0
  %v179 = vsel %vm175, %v152, 0.0
  %v180 = vpack.c.bf16 %v177, %v176
  %v181 = vpack.c.bf16 %v179, %v178
  %v182 = vld [vmem:[%s3] sm:$0xf]
  %vm183 = vcmask 64512
  %v185 = vsel %vm183, %v180, 0
  %v188 = vsel %vm183, %v181, 0
  %vm190 = vcmask 1043456
  %v192 = vsel %vm190, %v182, 0
  %194 = vmatpush.bf16.msra.mxu0 0
  %195 = vmatpush.bf16.msra.mxu0 0
  %196 = vmatpush.bf16.msra.mxu0 0
  %197 = vmatpush.bf16.msra.mxu0 0
  %198 = vmatpush.bf16.msra.mxu0 0
  %199 = vmatpush.bf16.msra.mxu0 0
  %200 = vmatpush.bf16.msra.mxu0 0
  %201 = vmatpush.bf16.msra.mxu0 %v192
  %202 = vmatmul.bf16.gmra.mxu0 %v185
  %v203 = vpop.f32.mrf.mxu0
  %v204 = vadd.f32 0.0, %v203
  %v205 = vpop.f32.mrf.mxu0
  %v206 = vadd.f32 0.0, %v205
  %207 = vmatmul.bf16.gmra.mxu0 %v188
  %v208 = vpop.f32.mrf.mxu0
  %v209 = vadd.f32 0.0, %v208
  %v210 = vpop.f32.mrf.mxu0
  %v211 = vadd.f32 0.0, %v210
  %212 = vdwg.mxu0
  %v214 = vperm.slane %v146, 0
  %v216 = vadd.f32 %v214, %v204
  %v217 = vadd.f32 %v214, %v206
  %v218 = vadd.f32 %v214, %v209
  %v219 = vadd.f32 %v214, %v211
  %v220 = vpack.c.bf16 %v90, %v89
  %v221 = vpack.c.bf16 %v92, %v91
  %s222 = scalar_lea.vmem %s3, 4
  %v223 = vld [vmem:[%s222] sm:$0xf]
  %v225 = vsel %vm183, %v220, 0
  %v228 = vsel %vm183, %v221, 0
  %v231 = vsel %vm190, %v223, 0
  %233 = vmatpush.bf16.msra.mxu0 0
  %234 = vmatpush.bf16.msra.mxu0 0
  %235 = vmatpush.bf16.msra.mxu0 0
  %236 = vmatpush.bf16.msra.mxu0 0
  %237 = vmatpush.bf16.msra.mxu0 0
  %238 = vmatpush.bf16.msra.mxu0 0
  %239 = vmatpush.bf16.msra.mxu0 0
  %240 = vmatpush.bf16.msra.mxu0 %v231
  %241 = vmatmul.bf16.gmra.mxu0 %v225
  %v242 = vpop.f32.mrf.mxu0
  %v243 = vadd.f32 0.0, %v242
  %v244 = vpop.f32.mrf.mxu0
  %v245 = vadd.f32 0.0, %v244
  %246 = vmatmul.bf16.gmra.mxu0 %v228
  %v247 = vpop.f32.mrf.mxu0
  %v248 = vadd.f32 0.0, %v247
  %v249 = vpop.f32.mrf.mxu0
  %v250 = vadd.f32 0.0, %v249
  %251 = vdwg.mxu0
  %v252 = vadd.f32 %v216, %v243
  %v253 = vadd.f32 %v217, %v245
  %v254 = vadd.f32 %v218, %v248
  %v255 = vadd.f32 %v219, %v250
  %v256 = vrot.slane %v89, 1
  %v257 = vrot.slane %v90, 1
  %v258 = vrot.slane %v91, 1
  %v259 = vrot.slane %v92, 1
  %vm260 = vcmp.lt.s32.totalorder %v94, 7
  %v261 = vsel %vm260, %v258, %v259
  %v262 = vsel %vm260, %v257, %v258
  %v263 = vsel %vm260, %v256, %v257
  %v264 = vsel %vm260, %v259, %v256
  %vm265 = vcmp.ge.s32.totalorder %v142, 4294967295
  %vm266 = vcmp.ge.s32.totalorder %v143, 4294967295
  %vm267 = vcmp.ge.s32.totalorder %v144, 4294967295
  %vm268 = vcmp.ge.s32.totalorder %v145, 4294967295
  %vm269 = vcmp.lt.s32.totalorder %v142, 15
  %vm270 = vcmp.lt.s32.totalorder %v143, 15
  %vm271 = vcmp.lt.s32.totalorder %v144, 15
  %vm272 = vcmp.lt.s32.totalorder %v145, 15
  %vm273 = vmand %vm265, %vm269
  %vm274 = vmand %vm266, %vm270
  %vm275 = vmand %vm267, %vm271
  %vm276 = vmand %vm268, %vm272
  %v277 = vsel %vm273, 1, 0
  %v278 = vsel %vm274, 1, 0
  %v279 = vsel %vm275, 1, 0
  %v280 = vsel %vm276, 1, 0
  %vm281 = vcmp.eq.s32.totalorder %v277, 1
  %vm282 = vcmp.eq.s32.totalorder %v278, 1
  %vm283 = vcmp.eq.s32.totalorder %v279, 1
  %vm284 = vcmp.eq.s32.totalorder %v280, 1
  %v285 = vsel %vm281, %v263, 0.0
  %v286 = vsel %vm282, %v262, 0.0
  %v287 = vsel %vm283, %v261, 0.0
  %v288 = vsel %vm284, %v264, 0.0
  %v289 = vpack.c.bf16 %v286, %v285
  %v290 = vpack.c.bf16 %v288, %v287
  %s291 = scalar_lea.vmem %s3, 8
  %v292 = vld [vmem:[%s291] sm:$0xf]
  %v294 = vsel %vm183, %v289, 0
  %v297 = vsel %vm183, %v290, 0
  %v300 = vsel %vm190, %v292, 0
  %302 = vmatpush.bf16.msra.mxu0 0
  %303 = vmatpush.bf16.msra.mxu0 0
  %304 = vmatpush.bf16.msra.mxu0 0
  %305 = vmatpush.bf16.msra.mxu0 0
  %306 = vmatpush.bf16.msra.mxu0 0
  %307 = vmatpush.bf16.msra.mxu0 0
  %308 = vmatpush.bf16.msra.mxu0 0
  %309 = vmatpush.bf16.msra.mxu0 %v300
  %310 = vmatmul.bf16.gmra.mxu0 %v294
  %v311 = vpop.f32.mrf.mxu0
  %v312 = vadd.f32 0.0, %v311
  %v313 = vpop.f32.mrf.mxu0
  %v314 = vadd.f32 0.0, %v313
  %315 = vmatmul.bf16.gmra.mxu0 %v297
  %v316 = vpop.f32.mrf.mxu0
  %v317 = vadd.f32 0.0, %v316
  %v318 = vpop.f32.mrf.mxu0
  %v319 = vadd.f32 0.0, %v318
  %320 = vdwg.mxu0
  %v321 = vadd.f32 %v252, %v312
  %v322 = vadd.f32 %v253, %v314
  %v323 = vadd.f32 %v254, %v317
  %v324 = vadd.f32 %v255, %v319
  %v325 = vld [vmem:[%s5] sm:$0x1]
  %v327 = vperm.slane %v325, 0
  %v329 = vmul.f32 %v321, %v327
  %v330 = vmul.f32 %v322, %v327
  %v331 = vmul.f32 %v323, %v327
  %v332 = vmul.f32 %v324, %v327
  %v333 = vld [vmem:[%s6] sm:$0x1]
  %v335 = vperm.slane %v333, 0
  %v337 = vadd.f32 %v329, %v335
  %v338 = vadd.f32 %v330, %v335
  %v339 = vadd.f32 %v331, %v335
  %v340 = vadd.f32 %v332, %v335
  %v341 = vmul.f32 %v337, 0.5
  %v342 = vmul.f32 %v338, 0.5
  %v343 = vmul.f32 %v339, 0.5
  %v344 = vmul.f32 %v340, 0.5
  %v345 = vmul.f32 %v337, 0.044715
  %v346 = vmul.f32 %v338, 0.044715
  %v347 = vmul.f32 %v339, 0.044715
  %v348 = vmul.f32 %v340, 0.044715
  %v349 = vmul.f32 %v345, %v337
  %v350 = vmul.f32 %v346, %v338
  %v351 = vmul.f32 %v347, %v339
  %v352 = vmul.f32 %v348, %v340
  %v353 = vmul.f32 %v349, %v337
  %v354 = vmul.f32 %v350, %v338
  %v355 = vmul.f32 %v351, %v339
  %v356 = vmul.f32 %v352, %v340
  %v357 = vadd.f32 %v337, %v353
  %v358 = vadd.f32 %v338, %v354
  %v359 = vadd.f32 %v339, %v355
  %v360 = vadd.f32 %v340, %v356
  %v361 = vmul.f32 %v357, 0.7978846
  %v362 = vmul.f32 %v358, 0.7978846
  %v363 = vmul.f32 %v359, 0.7978846
  %v364 = vmul.f32 %v360, 0.7978846
  %v365 = vtanh.pop %v361
  %v366 = vtanh.pop %v362
  %v367 = vtanh.pop %v363
  %v368 = vtanh.pop %v364
  %v369 = vadd.f32 %v365, 1.0
  %v370 = vadd.f32 %v366, 1.0
  %v371 = vadd.f32 %v367, 1.0
  %v372 = vadd.f32 %v368, 1.0
  %v373 = vmul.f32 %v341, %v369
  %v374 = vmul.f32 %v342, %v370
  %v375 = vmul.f32 %v343, %v371
  %v376 = vmul.f32 %v344, %v372
  %v377 = vpack.c.bf16 %v374, %v373
  %v378 = vpack.c.bf16 %v376, %v375
  %v379 = vld [vmem:[%s7] sm:$0xf]
  %v380 = vld [vmem:[%s8] sm:$0x1]
  %v382 = vperm.slane %v380, 0
  %v385 = vsel %vm183, %v377, 0
  %v388 = vsel %vm183, %v378, 0
  %v391 = vsel %vm190, %v379, 0
  %393 = vmatpush.bf16.msra.mxu0 0
  %394 = vmatpush.bf16.msra.mxu0 0
  %395 = vmatpush.bf16.msra.mxu0 0
  %396 = vmatpush.bf16.msra.mxu0 0
  %397 = vmatpush.bf16.msra.mxu0 0
  %398 = vmatpush.bf16.msra.mxu0 0
  %399 = vmatpush.bf16.msra.mxu0 0
  %400 = vmatpush.bf16.msra.mxu0 %v391
  %401 = vmatmul.bf16.gmra.mxu0 %v385
  %v402 = vpop.f32.mrf.mxu0
  %v403 = vadd.f32 %v382, %v402
  %v404 = vpop.f32.mrf.mxu0
  %v405 = vadd.f32 %v382, %v404
  %406 = vmatmul.bf16.gmra.mxu0 %v388
  %v407 = vpop.f32.mrf.mxu0
  %v408 = vadd.f32 %v382, %v407
  %v409 = vpop.f32.mrf.mxu0
  %v410 = vadd.f32 %v382, %v409
  %411 = vdwg.mxu0
  %v412 = vadd.f32 %v403, %v321
  %v413 = vadd.f32 %v405, %v322
  %v414 = vadd.f32 %v408, %v323
  %v415 = vadd.f32 %v410, %v324
  %416 = vst.msk [vmem:[#allocation2] sm:$0xff] %vm183, %v412
  %417 = vst.msk [vmem:[#allocation2 + $0x8] sm:$0xff] %vm183, %v413
  %418 = vst.msk [vmem:[#allocation2 + $0x10] sm:$0xff] %vm183, %v414
  %419 = vst.msk [vmem:[#allocation2 + $0x18] sm:$0xff] %vm183, %v415
  %v420 = vld [vmem:[#allocation2] ss:$2 sm:$0xff]
  %s421 = scalar_lea.vmem [#allocation2], 16
  %v422 = vld [vmem:[%s421] ss:$2 sm:$0xff]
  %s423 = scalar_lea.vmem [#allocation2], 1
  %v424 = vld [vmem:[%s423] ss:$2 sm:$0xff]
  %s425 = scalar_lea.vmem [#allocation2], 17
  %v426 = vld [vmem:[%s425] ss:$2 sm:$0xff]
  %v427 = vmax.f32 %v420, %v424
  %v428 = vmax.f32 %v422, %v426
  %v429 = vpack.c.bf16 %v427, %v427
  %v430 = vpack.c.bf16 %v428, %v428
  %vm431 = vcmask 60416
  %432 = vst.msk [vmem:[%s9] sm:$0xf] %vm431, %v429
  %433 = vst.msk [vmem:[%s9 + $0x4] sm:$0xf] %vm431, %v430
  // Predicated region
  $region38: #{conv_tower_forward.3} parent=0 // pred_check
    _
  $region39: #{conv_tower_forward.3} parent=0 // pred_check_branch
    %435 = sbr.rel (0) target = $region41
  $region40: #{conv_tower_forward.3} parent=0 // pred_region
    _
  $region41: #{conv_tower_forward.3} parent=0 // pred_fallthru
    _
  // Predicated region
  $region42: #{conv_tower_forward.3} parent=0 // pred_check
    _
  $region43: #{conv_tower_forward.3} parent=0 // pred_check_branch
    %437 = sbr.rel (0) target = $region45
  $region44: #{conv_tower_forward.3} parent=0 // pred_region
    _
  $region45: #{conv_tower_forward.3} parent=0 // pred_fallthru
    _

</llo_original>
